<compile_context>
chip_gen: v5e
topology: v5e:2x2
jax: 0.10.0
libtpu: 0.0.40
codegen_flags: <defaults>
</compile_context>

<pallas_src>
import numpy as np
import jax
import jax.numpy as jnp
from jax import lax
from jax.experimental import pallas as pl
from jax.experimental.pallas import tpu as pltpu

_LANES = 128
_CHUNK_SUB = 8                     # sublanes per inner compute chunk
_CHUNK = _CHUNK_SUB * _LANES       # 1024 batch elements = one f32 vreg / entry


def _round_up(x, m):
    return ((x + m - 1) // m) * m


def _cdiv(x, m):
    return (x + m - 1) // m


def _f32(v):
    return float(np.float32(v))


# ---- compile-time constant folding helpers (floats vs traced arrays) --------
def _isf(v):
    return isinstance(v, (int, float))


def _is0(v):
    return _isf(v) and float(v) == 0.0


def _is1(v):
    return _isf(v) and float(v) == 1.0


def _mul(x, y):
    if _is0(x) or _is0(y):
        return 0.0
    if _is1(x):
        return y
    if _is1(y):
        return x
    return x * y


def _neg(x):
    if _is0(x):
        return 0.0
    return -x


def _add(*terms):
    acc = 0.0
    for t in terms:
        if _is0(t):
            continue
        acc = t if _is0(acc) else acc + t
    return acc


# ---------------------------------------------------------------------------
# Kernel factory: bakes the static DH chain description into an unrolled kernel
# ---------------------------------------------------------------------------
def make_dht_kernel(dht_params):
    joints = []
    col = 0
    for cfg in dht_params:
        has_theta = 'theta' in cfg
        has_d = 'd' in cfg
        free = (not has_theta) or (not has_d)          # active_joints_mask
        alpha = np.float32(cfg.get('alpha', 0.0))
        joints.append({
            'pcol': col if free else None,
            # trig of compile-time constants done on the host (no runtime work)
            'ct': float(np.cos(np.float32(cfg['theta']))) if has_theta else None,
            'st': float(np.sin(np.float32(cfg['theta']))) if has_theta else None,
            'd': _f32(cfg['d']) if has_d else None,
            'a': _f32(cfg.get('a', 0.0)),
            'ca': float(np.cos(alpha)),
            'sa': float(np.sin(alpha)),
        })
        if free:
            col += 1
    n_active = col
    n_joints = len(joints)

    def kernel(params_ref, out_ref):
        # params_ref: (n_rows, SUB, 128)      -- batch on (sublane, lane)
        # out_ref   : (N*16, SUB, 128)        -- out[j*16+4*row+col, s, l]
        sub = params_ref.shape[1]
        n_chunks = sub // _CHUNK_SUB

        zeros = jnp.zeros((_CHUNK_SUB, _LANES), jnp.float32)
        ones = jnp.ones((_CHUNK_SUB, _LANES), jnp.float32)

        def as_arr(v):
            if _is0(v):
                return zeros
            if _is1(v):
                return ones
            if _isf(v):
                return jnp.full((_CHUNK_SUB, _LANES), v, jnp.float32)
            return v

        def compute_chunk(c):
            s0 = c * _CHUNK_SUB
            if not isinstance(s0, int):
                s0 = pl.multiple_of(s0, _CHUNK_SUB)

            P = None                                   # rows 0..2 of the pose
            for j, js in enumerate(joints):            # static N -> unrolled
                a, d, ca, sa = js['a'], js['d'], js['ca'], js['sa']
                ct, st = js['ct'], js['st']
                if js['pcol'] is not None:
                    x = params_ref[js['pcol'], pl.ds(s0, _CHUNK_SUB), :]  # (8,128)
                    if ct is None:                     # free theta -> runtime trig
                        ct, st = jnp.cos(x), jnp.sin(x)
                    if d is None:                      # free d (prismatic)
                        d = x

                # Standard DH matrix (bottom row [0,0,0,1] never computed):
                #   col0 = [ct, st, 0]        col1 = [-st*ca, ct*ca, sa]
                #   col2 = [st*sa, -ct*sa, ca]  col3 = [a*ct, a*st, d]
                t00, t10 = ct, st
                t01, t11, t21 = _neg(_mul(st, ca)), _mul(ct, ca), sa
                t02, t12, t22 = _mul(st, sa), _neg(_mul(ct, sa)), ca
                t03, t13, t23 = _mul(a, ct), _mul(a, st), d

                if P is None:
                    # pose_0 = I  =>  pose_1 = T_1 directly
                    P = [[t00, t01, t02, t03],
                         [t10, t11, t12, t13],
                         [0.0, t21, t22, t23]]
                else:
                    newP = []
                    for r in range(3):
                        p0, p1, p2, p3 = P[r]
                        newP.append([
                            _add(_mul(p0, t00), _mul(p1, t10)),
                            _add(_mul(p0, t01), _mul(p1, t11), _mul(p2, t21)),
                            _add(_mul(p0, t02), _mul(p1, t12), _mul(p2, t22)),
                            _add(_mul(p0, t03), _mul(p1, t13), _mul(p2, t23), p3),
                        ])
                    P = newP

                # Lane/sublane-dense full-vreg stores (static row index, dynamic
                # sublane offset aligned to 8). Bottom row stored as constants.
                base = j * 16
                for r in range(3):
                    for k in range(4):
                        out_ref[base + 4 * r + k, pl.ds(s0, _CHUNK_SUB), :] = \
                            as_arr(P[r][k])
                out_ref[base + 12, pl.ds(s0, _CHUNK_SUB), :] = zeros
                out_ref[base + 13, pl.ds(s0, _CHUNK_SUB), :] = zeros
                out_ref[base + 14, pl.ds(s0, _CHUNK_SUB), :] = zeros
                out_ref[base + 15, pl.ds(s0, _CHUNK_SUB), :] = ones

        if n_chunks == 1:
            compute_chunk(0)
        else:
            # Rolled loop bounds the live vreg set (~2x12 pose entries + trig
            # temps) regardless of tile size; body is heavy so loop overhead is
            # negligible.
            def body(c, carry):
                compute_chunk(c)
                return carry
            lax.fori_loop(0, n_chunks, body, 0)

    return kernel, n_active, n_joints


# ---------------------------------------------------------------------------
# Tile selection: big tiles (>=1 MiB writeback per grid step) but grid >= 2
# whenever the batch allows it (v7x megacore sharding).
# ---------------------------------------------------------------------------
def _choose_tiles(B, block_b):
    blk_chunks = max(1, block_b // _CHUNK)
    total_chunks = max(1, _cdiv(max(B, 1), _CHUNK))
    if total_chunks >= 2:
        tb_chunks = min(blk_chunks, max(1, (total_chunks + 1) // 2))
    else:
        tb_chunks = 1
    TB = tb_chunks * _CHUNK
    B_pad = _round_up(max(B, 1), TB)
    return TB, B_pad


# ---------------------------------------------------------------------------
# Wrapper: batch tiling, padding, and conversion to the PyTorch convention
# ---------------------------------------------------------------------------
def dht_model_forward(params, dht_params, *, block_b=8192, transpose_out=True):
    params = jnp.asarray(params, jnp.float32)
    B = params.shape[0]
    kernel, n_active, N = make_dht_kernel(dht_params)
    assert params.shape[1] == n_active, (params.shape, n_active)

    TB, B_pad = _choose_tiles(B, block_b)
    SUB = TB // _LANES
    n_rows = max(n_active, 1)

    params_t = jnp.zeros((n_rows, B_pad), jnp.float32)
    if n_active > 0 and B > 0:
        params_t = params_t.at[:n_active, :B].set(params.T)
    params_t = params_t.reshape(n_rows, B_pad // _LANES, _LANES)

    out = pl.pallas_call(
        kernel,
        out_shape=jax.ShapeDtypeStruct((N * 16, B_pad // _LANES, _LANES),
                                       jnp.float32),
        grid=(B_pad // TB,),
        in_specs=[pl.BlockSpec((n_rows, SUB, _LANES), lambda i: (0, i, 0))],
        out_specs=pl.BlockSpec((N * 16, SUB, _LANES), lambda i: (0, i, 0)),
        compiler_params=pltpu.CompilerParams(
            dimension_semantics=("parallel",)),      # shard batch tiles over TCs
    )(params_t)

    # Kernel-native layout: out[j, row, col, b] (free metadata reshape).
    out = out.reshape(N, 4, 4, B_pad)[..., :B]
    if not transpose_out:
        # Avoids an extra HBM pass; use when the consumer can take this layout.
        return out
    # PyTorch convention (B, N, 4, 4).
    return jnp.transpose(out, (3, 0, 1, 2))


# ---------------------------------------------------------------------------
# Pure-JAX reference that mirrors the torch einsum code exactly.
# ---------------------------------------------------------------------------
_THETA_COS = np.array([[1, 0, 0, 0], [0, 1, 0, 0], [0, 0, 0, 0], [0, 0, 0, 0]], np.float32)
_THETA_SIN = np.array([[0, -1, 0, 0], [1, 0, 0, 0], [0, 0, 0, 0], [0, 0, 0, 0]], np.float32)
_THETA_CONST = np.array([[0, 0, 0, 0], [0, 0, 0, 0], [0, 0, 1, 0], [0, 0, 0, 1]], np.float32)
_D_ = np.array([[0, 0, 0, 0], [0, 0, 0, 0], [0, 0, 0, 1], [0, 0, 0, 0]], np.float32)
_A_ = np.array([[0, 0, 0, 1], [0, 0, 0, 0], [0, 0, 0, 0], [0, 0, 0, 0]], np.float32)
_ALPHA_COS = np.array([[0, 0, 0, 0], [0, 1, 0, 0], [0, 0, 1, 0], [0, 0, 0, 0]], np.float32)
_ALPHA_SIN = np.array([[0, 0, 0, 0], [0, 0, -1, 0], [0, 1, 0, 0], [0, 0, 0, 0]], np.float32)
_ALPHA_CONST = np.array([[1, 0, 0, 0], [0, 0, 0, 0], [0, 0, 0, 0], [0, 0, 0, 1]], np.float32)


def dht_model_reference(params, dht_params):
    B = params.shape[0]
    eye = jnp.eye(4, dtype=jnp.float32)
    pose = jnp.tile(eye[None], (B, 1, 1))
    poses = []
    col = 0
    for cfg in dht_params:
        free = ('theta' not in cfg) or ('d' not in cfg)
        x = params[:, col:col + 1] if free else None
        if free:
            col += 1
        theta = jnp.full((B, 1), float(cfg['theta']), jnp.float32) if 'theta' in cfg else x
        d = jnp.full((B, 1), float(cfg['d']), jnp.float32) if 'd' in cfg else x
        a = jnp.full((B, 1), float(cfg.get('a', 0.0)), jnp.float32)
        alpha = jnp.full((B, 1), float(cfg.get('alpha', 0.0)), jnp.float32)

        T_theta = (jnp.einsum('xy,bz->bxy', _THETA_COS, jnp.cos(theta))
                   + jnp.einsum('xy,bz->bxy', _THETA_SIN, jnp.sin(theta))
                   + _THETA_CONST)
        T_d = jnp.einsum('xy,bz->bxy', _D_, d) + eye
        T_alpha = (jnp.einsum('xy,bz->bxy', _ALPHA_COS, jnp.cos(alpha))
                   + jnp.einsum('xy,bz->bxy', _ALPHA_SIN, jnp.sin(alpha))
                   + _ALPHA_CONST)
        T_a = jnp.einsum('xy,bz->bxy', _A_, a) + eye
        T = jnp.einsum('bij,bjk,bkl,blm->bim', T_theta, T_d, T_a, T_alpha)
        pose = jnp.einsum('bij,bjk->bik', pose, T)
        poses.append(pose)
    return jnp.stack(poses, 1)


# ---------------------------------------------------------------------------
if __name__ == "__main__":
    # Deterministic synthetic DH chain (4 joints: 3 revolute, 1 prismatic).
    dht_params = [
        {"d": 0.3, "a": 0.10, "alpha": np.pi / 2},       # free theta
        {"d": 0.0, "a": 0.25, "alpha": 0.0},             # free theta
        {"theta": 0.0, "a": 0.00, "alpha": -np.pi / 2},  # free d (prismatic)
        {"d": 0.1, "a": 0.15, "alpha": 0.0},             # free theta
    ]
    n_active = sum(int(('theta' not in c) or ('d' not in c)) for c in dht_params)

    key = jax.random.PRNGKey(0)
    # First case: tiny batch (single chunk, grid=1). Second case exercises
    # batch padding, a multi-step "parallel" grid and the rolled inner
    # chunk loop (grid=2, 2 chunks per grid step).
    for B, block_b in ((8, 8192), (2500, 2048)):
        kb, key = jax.random.split(key)
        params = jax.random.uniform(kb, (B, n_active), dtype=jnp.float32,
                                    minval=-1.0, maxval=1.0)
        out = jax.block_until_ready(
            dht_model_forward(params, dht_params, block_b=block_b))
        ref = dht_model_reference(params, dht_params)
        assert out.shape == (B, len(dht_params), 4, 4), out.shape
        np.testing.assert_allclose(np.asarray(out), np.asarray(ref),
                                   rtol=1e-5, atol=1e-5)
    print("KERNEL_OK")
</pallas_src>

<mosaic_0001>
module attributes {stable_mosaic.version = 11 : i64} {
  func.func @kernel(%arg0: i32, %arg1: memref<4x8x128xf32, #tpu.memory_space<vmem>>, %arg2: memref<64x8x128xf32, #tpu.memory_space<vmem>>) attributes {dimension_semantics = [#tpu.dimension_semantics<parallel>], iteration_bounds = array<i64: 1>, scalar_prefetch = 0 : i64, scratch_operands = 0 : i64, tpu.core_type = #tpu.core_type<tc>, window_params = [{transform_indices = @transform_0, window_bounds = array<i64: 4, 8, 128>}, {transform_indices = @transform_1, window_bounds = array<i64: 64, 8, 128>}]} {
    %cst = arith.constant 0.000000e+00 : f32
    %0 = vector.broadcast %cst : f32 to vector<8x128xf32>
    %cst_0 = arith.constant 1.000000e+00 : f32
    %1 = vector.broadcast %cst_0 : f32 to vector<8x128xf32>
    %c0 = arith.constant 0 : index
    %c0_1 = arith.constant 0 : index
    %c0_2 = arith.constant 0 : index
    %2 = vector.load %arg1[%c0, %c0_1, %c0_2] : memref<4x8x128xf32, #tpu.memory_space<vmem>>, vector<1x8x128xf32>
    %3 = vector.shape_cast %2 : vector<1x8x128xf32> to vector<8x128xf32>
    %4 = math.cos %3 : vector<8x128xf32>
    %5 = math.sin %3 : vector<8x128xf32>
    %cst_3 = arith.constant -4.37113883E-8 : f32
    %6 = vector.broadcast %cst_3 : f32 to vector<8x128xf32>
    %7 = arith.mulf %5, %6 : vector<8x128xf32>
    %cst_4 = arith.constant 0.000000e+00 : f32
    %8 = vector.broadcast %cst_4 : f32 to vector<8x128xf32>
    %9 = arith.subf %8, %7 : vector<8x128xf32>
    %cst_5 = arith.constant -4.37113883E-8 : f32
    %10 = vector.broadcast %cst_5 : f32 to vector<8x128xf32>
    %11 = arith.mulf %4, %10 : vector<8x128xf32>
    %cst_6 = arith.constant 0.000000e+00 : f32
    %12 = vector.broadcast %cst_6 : f32 to vector<8x128xf32>
    %13 = arith.subf %12, %4 : vector<8x128xf32>
    %cst_7 = arith.constant 1.000000e-01 : f32
    %14 = vector.broadcast %cst_7 : f32 to vector<8x128xf32>
    %15 = arith.mulf %14, %4 : vector<8x128xf32>
    %cst_8 = arith.constant 1.000000e-01 : f32
    %16 = vector.broadcast %cst_8 : f32 to vector<8x128xf32>
    %17 = arith.mulf %16, %5 : vector<8x128xf32>
    %c0_9 = arith.constant 0 : index
    %c0_10 = arith.constant 0 : index
    %c0_11 = arith.constant 0 : index
    %18 = vector.load %arg2[%c0_9, %c0_10, %c0_11] : memref<64x8x128xf32, #tpu.memory_space<vmem>>, vector<1x8x128xf32>
    %19 = vector.shape_cast %18 : vector<1x8x128xf32> to vector<8x128xf32>
    %20 = vector.shape_cast %4 : vector<8x128xf32> to vector<1x8x128xf32>
    tpu.vector_store %arg2[%c0_9, %c0_10, %c0_11], %20 {strides = array<i32>} : memref<64x8x128xf32, #tpu.memory_space<vmem>>, vector<1x8x128xf32>,
    %c1 = arith.constant 1 : index
    %c0_12 = arith.constant 0 : index
    %c0_13 = arith.constant 0 : index
    %21 = vector.load %arg2[%c1, %c0_12, %c0_13] : memref<64x8x128xf32, #tpu.memory_space<vmem>>, vector<1x8x128xf32>
    %22 = vector.shape_cast %21 : vector<1x8x128xf32> to vector<8x128xf32>
    %23 = vector.shape_cast %9 : vector<8x128xf32> to vector<1x8x128xf32>
    tpu.vector_store %arg2[%c1, %c0_12, %c0_13], %23 {strides = array<i32>} : memref<64x8x128xf32, #tpu.memory_space<vmem>>, vector<1x8x128xf32>,
    %c2 = arith.constant 2 : index
    %c0_14 = arith.constant 0 : index
    %c0_15 = arith.constant 0 : index
    %24 = vector.load %arg2[%c2, %c0_14, %c0_15] : memref<64x8x128xf32, #tpu.memory_space<vmem>>, vector<1x8x128xf32>
    %25 = vector.shape_cast %24 : vector<1x8x128xf32> to vector<8x128xf32>
    %26 = vector.shape_cast %5 : vector<8x128xf32> to vector<1x8x128xf32>
    tpu.vector_store %arg2[%c2, %c0_14, %c0_15], %26 {strides = array<i32>} : memref<64x8x128xf32, #tpu.memory_space<vmem>>, vector<1x8x128xf32>,
    %c3 = arith.constant 3 : index
    %c0_16 = arith.constant 0 : index
    %c0_17 = arith.constant 0 : index
    %27 = vector.load %arg2[%c3, %c0_16, %c0_17] : memref<64x8x128xf32, #tpu.memory_space<vmem>>, vector<1x8x128xf32>
    %28 = vector.shape_cast %27 : vector<1x8x128xf32> to vector<8x128xf32>
    %29 = vector.shape_cast %15 : vector<8x128xf32> to vector<1x8x128xf32>
    tpu.vector_store %arg2[%c3, %c0_16, %c0_17], %29 {strides = array<i32>} : memref<64x8x128xf32, #tpu.memory_space<vmem>>, vector<1x8x128xf32>,
    %c4 = arith.constant 4 : index
    %c0_18 = arith.constant 0 : index
    %c0_19 = arith.constant 0 : index
    %30 = vector.load %arg2[%c4, %c0_18, %c0_19] : memref<64x8x128xf32, #tpu.memory_space<vmem>>, vector<1x8x128xf32>
    %31 = vector.shape_cast %30 : vector<1x8x128xf32> to vector<8x128xf32>
    %32 = vector.shape_cast %5 : vector<8x128xf32> to vector<1x8x128xf32>
    tpu.vector_store %arg2[%c4, %c0_18, %c0_19], %32 {strides = array<i32>} : memref<64x8x128xf32, #tpu.memory_space<vmem>>, vector<1x8x128xf32>,
    %c5 = arith.constant 5 : index
    %c0_20 = arith.constant 0 : index
    %c0_21 = arith.constant 0 : index
    %33 = vector.load %arg2[%c5, %c0_20, %c0_21] : memref<64x8x128xf32, #tpu.memory_space<vmem>>, vector<1x8x128xf32>
    %34 = vector.shape_cast %33 : vector<1x8x128xf32> to vector<8x128xf32>
    %35 = vector.shape_cast %11 : vector<8x128xf32> to vector<1x8x128xf32>
    tpu.vector_store %arg2[%c5, %c0_20, %c0_21], %35 {strides = array<i32>} : memref<64x8x128xf32, #tpu.memory_space<vmem>>, vector<1x8x128xf32>,
    %c6 = arith.constant 6 : index
    %c0_22 = arith.constant 0 : index
    %c0_23 = arith.constant 0 : index
    %36 = vector.load %arg2[%c6, %c0_22, %c0_23] : memref<64x8x128xf32, #tpu.memory_space<vmem>>, vector<1x8x128xf32>
    %37 = vector.shape_cast %36 : vector<1x8x128xf32> to vector<8x128xf32>
    %38 = vector.shape_cast %13 : vector<8x128xf32> to vector<1x8x128xf32>
    tpu.vector_store %arg2[%c6, %c0_22, %c0_23], %38 {strides = array<i32>} : memref<64x8x128xf32, #tpu.memory_space<vmem>>, vector<1x8x128xf32>,
    %c7 = arith.constant 7 : index
    %c0_24 = arith.constant 0 : index
    %c0_25 = arith.constant 0 : index
    %39 = vector.load %arg2[%c7, %c0_24, %c0_25] : memref<64x8x128xf32, #tpu.memory_space<vmem>>, vector<1x8x128xf32>
    %40 = vector.shape_cast %39 : vector<1x8x128xf32> to vector<8x128xf32>
    %41 = vector.shape_cast %17 : vector<8x128xf32> to vector<1x8x128xf32>
    tpu.vector_store %arg2[%c7, %c0_24, %c0_25], %41 {strides = array<i32>} : memref<64x8x128xf32, #tpu.memory_space<vmem>>, vector<1x8x128xf32>,
    %c8 = arith.constant 8 : index
    %c0_26 = arith.constant 0 : index
    %c0_27 = arith.constant 0 : index
    %42 = vector.load %arg2[%c8, %c0_26, %c0_27] : memref<64x8x128xf32, #tpu.memory_space<vmem>>, vector<1x8x128xf32>
    %43 = vector.shape_cast %42 : vector<1x8x128xf32> to vector<8x128xf32>
    %44 = vector.shape_cast %0 : vector<8x128xf32> to vector<1x8x128xf32>
    tpu.vector_store %arg2[%c8, %c0_26, %c0_27], %44 {strides = array<i32>} : memref<64x8x128xf32, #tpu.memory_space<vmem>>, vector<1x8x128xf32>,
    %c9 = arith.constant 9 : index
    %c0_28 = arith.constant 0 : index
    %c0_29 = arith.constant 0 : index
    %45 = vector.load %arg2[%c9, %c0_28, %c0_29] : memref<64x8x128xf32, #tpu.memory_space<vmem>>, vector<1x8x128xf32>
    %46 = vector.shape_cast %45 : vector<1x8x128xf32> to vector<8x128xf32>
    %47 = vector.shape_cast %1 : vector<8x128xf32> to vector<1x8x128xf32>
    tpu.vector_store %arg2[%c9, %c0_28, %c0_29], %47 {strides = array<i32>} : memref<64x8x128xf32, #tpu.memory_space<vmem>>, vector<1x8x128xf32>,
    %cst_30 = arith.constant -4.37113883E-8 : f32
    %48 = vector.broadcast %cst_30 : f32 to vector<8x128xf32>
    %c10 = arith.constant 10 : index
    %c0_31 = arith.constant 0 : index
    %c0_32 = arith.constant 0 : index
    %49 = vector.load %arg2[%c10, %c0_31, %c0_32] : memref<64x8x128xf32, #tpu.memory_space<vmem>>, vector<1x8x128xf32>
    %50 = vector.shape_cast %49 : vector<1x8x128xf32> to vector<8x128xf32>
    %51 = vector.shape_cast %48 : vector<8x128xf32> to vector<1x8x128xf32>
    tpu.vector_store %arg2[%c10, %c0_31, %c0_32], %51 {strides = array<i32>} : memref<64x8x128xf32, #tpu.memory_space<vmem>>, vector<1x8x128xf32>,
    %cst_33 = arith.constant 3.000000e-01 : f32
    %52 = vector.broadcast %cst_33 : f32 to vector<8x128xf32>
    %c11 = arith.constant 11 : index
    %c0_34 = arith.constant 0 : index
    %c0_35 = arith.constant 0 : index
    %53 = vector.load %arg2[%c11, %c0_34, %c0_35] : memref<64x8x128xf32, #tpu.memory_space<vmem>>, vector<1x8x128xf32>
    %54 = vector.shape_cast %53 : vector<1x8x128xf32> to vector<8x128xf32>
    %55 = vector.shape_cast %52 : vector<8x128xf32> to vector<1x8x128xf32>
    tpu.vector_store %arg2[%c11, %c0_34, %c0_35], %55 {strides = array<i32>} : memref<64x8x128xf32, #tpu.memory_space<vmem>>, vector<1x8x128xf32>,
    %c12 = arith.constant 12 : index
    %c0_36 = arith.constant 0 : index
    %c0_37 = arith.constant 0 : index
    %56 = vector.load %arg2[%c12, %c0_36, %c0_37] : memref<64x8x128xf32, #tpu.memory_space<vmem>>, vector<1x8x128xf32>
    %57 = vector.shape_cast %56 : vector<1x8x128xf32> to vector<8x128xf32>
    %58 = vector.shape_cast %0 : vector<8x128xf32> to vector<1x8x128xf32>
    tpu.vector_store %arg2[%c12, %c0_36, %c0_37], %58 {strides = array<i32>} : memref<64x8x128xf32, #tpu.memory_space<vmem>>, vector<1x8x128xf32>,
    %c13 = arith.constant 13 : index
    %c0_38 = arith.constant 0 : index
    %c0_39 = arith.constant 0 : index
    %59 = vector.load %arg2[%c13, %c0_38, %c0_39] : memref<64x8x128xf32, #tpu.memory_space<vmem>>, vector<1x8x128xf32>
    %60 = vector.shape_cast %59 : vector<1x8x128xf32> to vector<8x128xf32>
    %61 = vector.shape_cast %0 : vector<8x128xf32> to vector<1x8x128xf32>
    tpu.vector_store %arg2[%c13, %c0_38, %c0_39], %61 {strides = array<i32>} : memref<64x8x128xf32, #tpu.memory_space<vmem>>, vector<1x8x128xf32>,
    %c14 = arith.constant 14 : index
    %c0_40 = arith.constant 0 : index
    %c0_41 = arith.constant 0 : index
    %62 = vector.load %arg2[%c14, %c0_40, %c0_41] : memref<64x8x128xf32, #tpu.memory_space<vmem>>, vector<1x8x128xf32>
    %63 = vector.shape_cast %62 : vector<1x8x128xf32> to vector<8x128xf32>
    %64 = vector.shape_cast %0 : vector<8x128xf32> to vector<1x8x128xf32>
    tpu.vector_store %arg2[%c14, %c0_40, %c0_41], %64 {strides = array<i32>} : memref<64x8x128xf32, #tpu.memory_space<vmem>>, vector<1x8x128xf32>,
    %c15 = arith.constant 15 : index
    %c0_42 = arith.constant 0 : index
    %c0_43 = arith.constant 0 : index
    %65 = vector.load %arg2[%c15, %c0_42, %c0_43] : memref<64x8x128xf32, #tpu.memory_space<vmem>>, vector<1x8x128xf32>
    %66 = vector.shape_cast %65 : vector<1x8x128xf32> to vector<8x128xf32>
    %67 = vector.shape_cast %1 : vector<8x128xf32> to vector<1x8x128xf32>
    tpu.vector_store %arg2[%c15, %c0_42, %c0_43], %67 {strides = array<i32>} : memref<64x8x128xf32, #tpu.memory_space<vmem>>, vector<1x8x128xf32>,
    %c1_44 = arith.constant 1 : index
    %c0_45 = arith.constant 0 : index
    %c0_46 = arith.constant 0 : index
    %68 = vector.load %arg1[%c1_44, %c0_45, %c0_46] : memref<4x8x128xf32, #tpu.memory_space<vmem>>, vector<1x8x128xf32>
    %69 = vector.shape_cast %68 : vector<1x8x128xf32> to vector<8x128xf32>
    %70 = math.cos %69 : vector<8x128xf32>
    %71 = math.sin %69 : vector<8x128xf32>
    %cst_47 = arith.constant 0.000000e+00 : f32
    %72 = vector.broadcast %cst_47 : f32 to vector<8x128xf32>
    %73 = arith.subf %72, %71 : vector<8x128xf32>
    %cst_48 = arith.constant 2.500000e-01 : f32
    %74 = vector.broadcast %cst_48 : f32 to vector<8x128xf32>
    %75 = arith.mulf %74, %70 : vector<8x128xf32>
    %cst_49 = arith.constant 2.500000e-01 : f32
    %76 = vector.broadcast %cst_49 : f32 to vector<8x128xf32>
    %77 = arith.mulf %76, %71 : vector<8x128xf32>
    %78 = arith.mulf %4, %70 : vector<8x128xf32>
    %79 = arith.mulf %9, %71 : vector<8x128xf32>
    %80 = arith.addf %78, %79 : vector<8x128xf32>
    %81 = arith.mulf %4, %73 : vector<8x128xf32>
    %82 = arith.mulf %9, %70 : vector<8x128xf32>
    %83 = arith.addf %81, %82 : vector<8x128xf32>
    %84 = arith.mulf %4, %75 : vector<8x128xf32>
    %85 = arith.mulf %9, %77 : vector<8x128xf32>
    %86 = arith.addf %84, %85 : vector<8x128xf32>
    %87 = arith.addf %86, %15 : vector<8x128xf32>
    %88 = arith.mulf %5, %70 : vector<8x128xf32>
    %89 = arith.mulf %11, %71 : vector<8x128xf32>
    %90 = arith.addf %88, %89 : vector<8x128xf32>
    %91 = arith.mulf %5, %73 : vector<8x128xf32>
    %92 = arith.mulf %11, %70 : vector<8x128xf32>
    %93 = arith.addf %91, %92 : vector<8x128xf32>
    %94 = arith.mulf %5, %75 : vector<8x128xf32>
    %95 = arith.mulf %11, %77 : vector<8x128xf32>
    %96 = arith.addf %94, %95 : vector<8x128xf32>
    %97 = arith.addf %96, %17 : vector<8x128xf32>
    %cst_50 = arith.constant 3.000000e-01 : f32
    %98 = vector.broadcast %cst_50 : f32 to vector<8x128xf32>
    %99 = arith.addf %77, %98 : vector<8x128xf32>
    %c16 = arith.constant 16 : index
    %c0_51 = arith.constant 0 : index
    %c0_52 = arith.constant 0 : index
    %100 = vector.load %arg2[%c16, %c0_51, %c0_52] : memref<64x8x128xf32, #tpu.memory_space<vmem>>, vector<1x8x128xf32>
    %101 = vector.shape_cast %100 : vector<1x8x128xf32> to vector<8x128xf32>
    %102 = vector.shape_cast %80 : vector<8x128xf32> to vector<1x8x128xf32>
    tpu.vector_store %arg2[%c16, %c0_51, %c0_52], %102 {strides = array<i32>} : memref<64x8x128xf32, #tpu.memory_space<vmem>>, vector<1x8x128xf32>,
    %c17 = arith.constant 17 : index
    %c0_53 = arith.constant 0 : index
    %c0_54 = arith.constant 0 : index
    %103 = vector.load %arg2[%c17, %c0_53, %c0_54] : memref<64x8x128xf32, #tpu.memory_space<vmem>>, vector<1x8x128xf32>
    %104 = vector.shape_cast %103 : vector<1x8x128xf32> to vector<8x128xf32>
    %105 = vector.shape_cast %83 : vector<8x128xf32> to vector<1x8x128xf32>
    tpu.vector_store %arg2[%c17, %c0_53, %c0_54], %105 {strides = array<i32>} : memref<64x8x128xf32, #tpu.memory_space<vmem>>, vector<1x8x128xf32>,
    %c18 = arith.constant 18 : index
    %c0_55 = arith.constant 0 : index
    %c0_56 = arith.constant 0 : index
    %106 = vector.load %arg2[%c18, %c0_55, %c0_56] : memref<64x8x128xf32, #tpu.memory_space<vmem>>, vector<1x8x128xf32>
    %107 = vector.shape_cast %106 : vector<1x8x128xf32> to vector<8x128xf32>
    %108 = vector.shape_cast %5 : vector<8x128xf32> to vector<1x8x128xf32>
    tpu.vector_store %arg2[%c18, %c0_55, %c0_56], %108 {strides = array<i32>} : memref<64x8x128xf32, #tpu.memory_space<vmem>>, vector<1x8x128xf32>,
    %c19 = arith.constant 19 : index
    %c0_57 = arith.constant 0 : index
    %c0_58 = arith.constant 0 : index
    %109 = vector.load %arg2[%c19, %c0_57, %c0_58] : memref<64x8x128xf32, #tpu.memory_space<vmem>>, vector<1x8x128xf32>
    %110 = vector.shape_cast %109 : vector<1x8x128xf32> to vector<8x128xf32>
    %111 = vector.shape_cast %87 : vector<8x128xf32> to vector<1x8x128xf32>
    tpu.vector_store %arg2[%c19, %c0_57, %c0_58], %111 {strides = array<i32>} : memref<64x8x128xf32, #tpu.memory_space<vmem>>, vector<1x8x128xf32>,
    %c20 = arith.constant 20 : index
    %c0_59 = arith.constant 0 : index
    %c0_60 = arith.constant 0 : index
    %112 = vector.load %arg2[%c20, %c0_59, %c0_60] : memref<64x8x128xf32, #tpu.memory_space<vmem>>, vector<1x8x128xf32>
    %113 = vector.shape_cast %112 : vector<1x8x128xf32> to vector<8x128xf32>
    %114 = vector.shape_cast %90 : vector<8x128xf32> to vector<1x8x128xf32>
    tpu.vector_store %arg2[%c20, %c0_59, %c0_60], %114 {strides = array<i32>} : memref<64x8x128xf32, #tpu.memory_space<vmem>>, vector<1x8x128xf32>,
    %c21 = arith.constant 21 : index
    %c0_61 = arith.constant 0 : index
    %c0_62 = arith.constant 0 : index
    %115 = vector.load %arg2[%c21, %c0_61, %c0_62] : memref<64x8x128xf32, #tpu.memory_space<vmem>>, vector<1x8x128xf32>
    %116 = vector.shape_cast %115 : vector<1x8x128xf32> to vector<8x128xf32>
    %117 = vector.shape_cast %93 : vector<8x128xf32> to vector<1x8x128xf32>
    tpu.vector_store %arg2[%c21, %c0_61, %c0_62], %117 {strides = array<i32>} : memref<64x8x128xf32, #tpu.memory_space<vmem>>, vector<1x8x128xf32>,
    %c22 = arith.constant 22 : index
    %c0_63 = arith.constant 0 : index
    %c0_64 = arith.constant 0 : index
    %118 = vector.load %arg2[%c22, %c0_63, %c0_64] : memref<64x8x128xf32, #tpu.memory_space<vmem>>, vector<1x8x128xf32>
    %119 = vector.shape_cast %118 : vector<1x8x128xf32> to vector<8x128xf32>
    %120 = vector.shape_cast %13 : vector<8x128xf32> to vector<1x8x128xf32>
    tpu.vector_store %arg2[%c22, %c0_63, %c0_64], %120 {strides = array<i32>} : memref<64x8x128xf32, #tpu.memory_space<vmem>>, vector<1x8x128xf32>,
    %c23 = arith.constant 23 : index
    %c0_65 = arith.constant 0 : index
    %c0_66 = arith.constant 0 : index
    %121 = vector.load %arg2[%c23, %c0_65, %c0_66] : memref<64x8x128xf32, #tpu.memory_space<vmem>>, vector<1x8x128xf32>
    %122 = vector.shape_cast %121 : vector<1x8x128xf32> to vector<8x128xf32>
    %123 = vector.shape_cast %97 : vector<8x128xf32> to vector<1x8x128xf32>
    tpu.vector_store %arg2[%c23, %c0_65, %c0_66], %123 {strides = array<i32>} : memref<64x8x128xf32, #tpu.memory_space<vmem>>, vector<1x8x128xf32>,
    %c24 = arith.constant 24 : index
    %c0_67 = arith.constant 0 : index
    %c0_68 = arith.constant 0 : index
    %124 = vector.load %arg2[%c24, %c0_67, %c0_68] : memref<64x8x128xf32, #tpu.memory_space<vmem>>, vector<1x8x128xf32>
    %125 = vector.shape_cast %124 : vector<1x8x128xf32> to vector<8x128xf32>
    %126 = vector.shape_cast %71 : vector<8x128xf32> to vector<1x8x128xf32>
    tpu.vector_store %arg2[%c24, %c0_67, %c0_68], %126 {strides = array<i32>} : memref<64x8x128xf32, #tpu.memory_space<vmem>>, vector<1x8x128xf32>,
    %c25 = arith.constant 25 : index
    %c0_69 = arith.constant 0 : index
    %c0_70 = arith.constant 0 : index
    %127 = vector.load %arg2[%c25, %c0_69, %c0_70] : memref<64x8x128xf32, #tpu.memory_space<vmem>>, vector<1x8x128xf32>
    %128 = vector.shape_cast %127 : vector<1x8x128xf32> to vector<8x128xf32>
    %129 = vector.shape_cast %70 : vector<8x128xf32> to vector<1x8x128xf32>
    tpu.vector_store %arg2[%c25, %c0_69, %c0_70], %129 {strides = array<i32>} : memref<64x8x128xf32, #tpu.memory_space<vmem>>, vector<1x8x128xf32>,
    %cst_71 = arith.constant -4.37113883E-8 : f32
    %130 = vector.broadcast %cst_71 : f32 to vector<8x128xf32>
    %c26 = arith.constant 26 : index
    %c0_72 = arith.constant 0 : index
    %c0_73 = arith.constant 0 : index
    %131 = vector.load %arg2[%c26, %c0_72, %c0_73] : memref<64x8x128xf32, #tpu.memory_space<vmem>>, vector<1x8x128xf32>
    %132 = vector.shape_cast %131 : vector<1x8x128xf32> to vector<8x128xf32>
    %133 = vector.shape_cast %130 : vector<8x128xf32> to vector<1x8x128xf32>
    tpu.vector_store %arg2[%c26, %c0_72, %c0_73], %133 {strides = array<i32>} : memref<64x8x128xf32, #tpu.memory_space<vmem>>, vector<1x8x128xf32>,
    %c27 = arith.constant 27 : index
    %c0_74 = arith.constant 0 : index
    %c0_75 = arith.constant 0 : index
    %134 = vector.load %arg2[%c27, %c0_74, %c0_75] : memref<64x8x128xf32, #tpu.memory_space<vmem>>, vector<1x8x128xf32>
    %135 = vector.shape_cast %134 : vector<1x8x128xf32> to vector<8x128xf32>
    %136 = vector.shape_cast %99 : vector<8x128xf32> to vector<1x8x128xf32>
    tpu.vector_store %arg2[%c27, %c0_74, %c0_75], %136 {strides = array<i32>} : memref<64x8x128xf32, #tpu.memory_space<vmem>>, vector<1x8x128xf32>,
    %c28 = arith.constant 28 : index
    %c0_76 = arith.constant 0 : index
    %c0_77 = arith.constant 0 : index
    %137 = vector.load %arg2[%c28, %c0_76, %c0_77] : memref<64x8x128xf32, #tpu.memory_space<vmem>>, vector<1x8x128xf32>
    %138 = vector.shape_cast %137 : vector<1x8x128xf32> to vector<8x128xf32>
    %139 = vector.shape_cast %0 : vector<8x128xf32> to vector<1x8x128xf32>
    tpu.vector_store %arg2[%c28, %c0_76, %c0_77], %139 {strides = array<i32>} : memref<64x8x128xf32, #tpu.memory_space<vmem>>, vector<1x8x128xf32>,
    %c29 = arith.constant 29 : index
    %c0_78 = arith.constant 0 : index
    %c0_79 = arith.constant 0 : index
    %140 = vector.load %arg2[%c29, %c0_78, %c0_79] : memref<64x8x128xf32, #tpu.memory_space<vmem>>, vector<1x8x128xf32>
    %141 = vector.shape_cast %140 : vector<1x8x128xf32> to vector<8x128xf32>
    %142 = vector.shape_cast %0 : vector<8x128xf32> to vector<1x8x128xf32>
    tpu.vector_store %arg2[%c29, %c0_78, %c0_79], %142 {strides = array<i32>} : memref<64x8x128xf32, #tpu.memory_space<vmem>>, vector<1x8x128xf32>,
    %c30 = arith.constant 30 : index
    %c0_80 = arith.constant 0 : index
    %c0_81 = arith.constant 0 : index
    %143 = vector.load %arg2[%c30, %c0_80, %c0_81] : memref<64x8x128xf32, #tpu.memory_space<vmem>>, vector<1x8x128xf32>
    %144 = vector.shape_cast %143 : vector<1x8x128xf32> to vector<8x128xf32>
    %145 = vector.shape_cast %0 : vector<8x128xf32> to vector<1x8x128xf32>
    tpu.vector_store %arg2[%c30, %c0_80, %c0_81], %145 {strides = array<i32>} : memref<64x8x128xf32, #tpu.memory_space<vmem>>, vector<1x8x128xf32>,
    %c31 = arith.constant 31 : index
    %c0_82 = arith.constant 0 : index
    %c0_83 = arith.constant 0 : index
    %146 = vector.load %arg2[%c31, %c0_82, %c0_83] : memref<64x8x128xf32, #tpu.memory_space<vmem>>, vector<1x8x128xf32>
    %147 = vector.shape_cast %146 : vector<1x8x128xf32> to vector<8x128xf32>
    %148 = vector.shape_cast %1 : vector<8x128xf32> to vector<1x8x128xf32>
    tpu.vector_store %arg2[%c31, %c0_82, %c0_83], %148 {strides = array<i32>} : memref<64x8x128xf32, #tpu.memory_space<vmem>>, vector<1x8x128xf32>,
    %c2_84 = arith.constant 2 : index
    %c0_85 = arith.constant 0 : index
    %c0_86 = arith.constant 0 : index
    %149 = vector.load %arg1[%c2_84, %c0_85, %c0_86] : memref<4x8x128xf32, #tpu.memory_space<vmem>>, vector<1x8x128xf32>
    %150 = vector.shape_cast %149 : vector<1x8x128xf32> to vector<8x128xf32>
    %cst_87 = arith.constant -4.37113883E-8 : f32
    %151 = vector.broadcast %cst_87 : f32 to vector<8x128xf32>
    %152 = arith.mulf %83, %151 : vector<8x128xf32>
    %cst_88 = arith.constant -1.000000e+00 : f32
    %153 = vector.broadcast %cst_88 : f32 to vector<8x128xf32>
    %154 = arith.mulf %5, %153 : vector<8x128xf32>
    %155 = arith.addf %152, %154 : vector<8x128xf32>
    %cst_89 = arith.constant -4.37113883E-8 : f32
    %156 = vector.broadcast %cst_89 : f32 to vector<8x128xf32>
    %157 = arith.mulf %5, %156 : vector<8x128xf32>
    %158 = arith.addf %83, %157 : vector<8x128xf32>
    %159 = arith.mulf %5, %150 : vector<8x128xf32>
    %160 = arith.addf %159, %87 : vector<8x128xf32>
    %cst_90 = arith.constant -4.37113883E-8 : f32
    %161 = vector.broadcast %cst_90 : f32 to vector<8x128xf32>
    %162 = arith.mulf %93, %161 : vector<8x128xf32>
    %cst_91 = arith.constant -1.000000e+00 : f32
    %163 = vector.broadcast %cst_91 : f32 to vector<8x128xf32>
    %164 = arith.mulf %13, %163 : vector<8x128xf32>
    %165 = arith.addf %162, %164 : vector<8x128xf32>
    %cst_92 = arith.constant -4.37113883E-8 : f32
    %166 = vector.broadcast %cst_92 : f32 to vector<8x128xf32>
    %167 = arith.mulf %13, %166 : vector<8x128xf32>
    %168 = arith.addf %93, %167 : vector<8x128xf32>
    %169 = arith.mulf %13, %150 : vector<8x128xf32>
    %170 = arith.addf %169, %97 : vector<8x128xf32>
    %cst_93 = arith.constant -4.37113883E-8 : f32
    %171 = vector.broadcast %cst_93 : f32 to vector<8x128xf32>
    %172 = arith.mulf %70, %171 : vector<8x128xf32>
    %cst_94 = arith.constant 4.37113883E-8 : f32
    %173 = vector.broadcast %cst_94 : f32 to vector<8x128xf32>
    %174 = arith.addf %172, %173 : vector<8x128xf32>
    %cst_95 = arith.constant 1.91068547E-15 : f32
    %175 = vector.broadcast %cst_95 : f32 to vector<8x128xf32>
    %176 = arith.addf %70, %175 : vector<8x128xf32>
    %cst_96 = arith.constant -4.37113883E-8 : f32
    %177 = vector.broadcast %cst_96 : f32 to vector<8x128xf32>
    %178 = arith.mulf %177, %150 : vector<8x128xf32>
    %179 = arith.addf %178, %99 : vector<8x128xf32>
    %c32 = arith.constant 32 : index
    %c0_97 = arith.constant 0 : index
    %c0_98 = arith.constant 0 : index
    %180 = vector.load %arg2[%c32, %c0_97, %c0_98] : memref<64x8x128xf32, #tpu.memory_space<vmem>>, vector<1x8x128xf32>
    %181 = vector.shape_cast %180 : vector<1x8x128xf32> to vector<8x128xf32>
    %182 = vector.shape_cast %80 : vector<8x128xf32> to vector<1x8x128xf32>
    tpu.vector_store %arg2[%c32, %c0_97, %c0_98], %182 {strides = array<i32>} : memref<64x8x128xf32, #tpu.memory_space<vmem>>, vector<1x8x128xf32>,
    %c33 = arith.constant 33 : index
    %c0_99 = arith.constant 0 : index
    %c0_100 = arith.constant 0 : index
    %183 = vector.load %arg2[%c33, %c0_99, %c0_100] : memref<64x8x128xf32, #tpu.memory_space<vmem>>, vector<1x8x128xf32>
    %184 = vector.shape_cast %183 : vector<1x8x128xf32> to vector<8x128xf32>
    %185 = vector.shape_cast %155 : vector<8x128xf32> to vector<1x8x128xf32>
    tpu.vector_store %arg2[%c33, %c0_99, %c0_100], %185 {strides = array<i32>} : memref<64x8x128xf32, #tpu.memory_space<vmem>>, vector<1x8x128xf32>,
    %c34 = arith.constant 34 : index
    %c0_101 = arith.constant 0 : index
    %c0_102 = arith.constant 0 : index
    %186 = vector.load %arg2[%c34, %c0_101, %c0_102] : memref<64x8x128xf32, #tpu.memory_space<vmem>>, vector<1x8x128xf32>
    %187 = vector.shape_cast %186 : vector<1x8x128xf32> to vector<8x128xf32>
    %188 = vector.shape_cast %158 : vector<8x128xf32> to vector<1x8x128xf32>
    tpu.vector_store %arg2[%c34, %c0_101, %c0_102], %188 {strides = array<i32>} : memref<64x8x128xf32, #tpu.memory_space<vmem>>, vector<1x8x128xf32>,
    %c35 = arith.constant 35 : index
    %c0_103 = arith.constant 0 : index
    %c0_104 = arith.constant 0 : index
    %189 = vector.load %arg2[%c35, %c0_103, %c0_104] : memref<64x8x128xf32, #tpu.memory_space<vmem>>, vector<1x8x128xf32>
    %190 = vector.shape_cast %189 : vector<1x8x128xf32> to vector<8x128xf32>
    %191 = vector.shape_cast %160 : vector<8x128xf32> to vector<1x8x128xf32>
    tpu.vector_store %arg2[%c35, %c0_103, %c0_104], %191 {strides = array<i32>} : memref<64x8x128xf32, #tpu.memory_space<vmem>>, vector<1x8x128xf32>,
    %c36 = arith.constant 36 : index
    %c0_105 = arith.constant 0 : index
    %c0_106 = arith.constant 0 : index
    %192 = vector.load %arg2[%c36, %c0_105, %c0_106] : memref<64x8x128xf32, #tpu.memory_space<vmem>>, vector<1x8x128xf32>
    %193 = vector.shape_cast %192 : vector<1x8x128xf32> to vector<8x128xf32>
    %194 = vector.shape_cast %90 : vector<8x128xf32> to vector<1x8x128xf32>
    tpu.vector_store %arg2[%c36, %c0_105, %c0_106], %194 {strides = array<i32>} : memref<64x8x128xf32, #tpu.memory_space<vmem>>, vector<1x8x128xf32>,
    %c37 = arith.constant 37 : index
    %c0_107 = arith.constant 0 : index
    %c0_108 = arith.constant 0 : index
    %195 = vector.load %arg2[%c37, %c0_107, %c0_108] : memref<64x8x128xf32, #tpu.memory_space<vmem>>, vector<1x8x128xf32>
    %196 = vector.shape_cast %195 : vector<1x8x128xf32> to vector<8x128xf32>
    %197 = vector.shape_cast %165 : vector<8x128xf32> to vector<1x8x128xf32>
    tpu.vector_store %arg2[%c37, %c0_107, %c0_108], %197 {strides = array<i32>} : memref<64x8x128xf32, #tpu.memory_space<vmem>>, vector<1x8x128xf32>,
    %c38 = arith.constant 38 : index
    %c0_109 = arith.constant 0 : index
    %c0_110 = arith.constant 0 : index
    %198 = vector.load %arg2[%c38, %c0_109, %c0_110] : memref<64x8x128xf32, #tpu.memory_space<vmem>>, vector<1x8x128xf32>
    %199 = vector.shape_cast %198 : vector<1x8x128xf32> to vector<8x128xf32>
    %200 = vector.shape_cast %168 : vector<8x128xf32> to vector<1x8x128xf32>
    tpu.vector_store %arg2[%c38, %c0_109, %c0_110], %200 {strides = array<i32>} : memref<64x8x128xf32, #tpu.memory_space<vmem>>, vector<1x8x128xf32>,
    %c39 = arith.constant 39 : index
    %c0_111 = arith.constant 0 : index
    %c0_112 = arith.constant 0 : index
    %201 = vector.load %arg2[%c39, %c0_111, %c0_112] : memref<64x8x128xf32, #tpu.memory_space<vmem>>, vector<1x8x128xf32>
    %202 = vector.shape_cast %201 : vector<1x8x128xf32> to vector<8x128xf32>
    %203 = vector.shape_cast %170 : vector<8x128xf32> to vector<1x8x128xf32>
    tpu.vector_store %arg2[%c39, %c0_111, %c0_112], %203 {strides = array<i32>} : memref<64x8x128xf32, #tpu.memory_space<vmem>>, vector<1x8x128xf32>,
    %c40 = arith.constant 40 : index
    %c0_113 = arith.constant 0 : index
    %c0_114 = arith.constant 0 : index
    %204 = vector.load %arg2[%c40, %c0_113, %c0_114] : memref<64x8x128xf32, #tpu.memory_space<vmem>>, vector<1x8x128xf32>
    %205 = vector.shape_cast %204 : vector<1x8x128xf32> to vector<8x128xf32>
    %206 = vector.shape_cast %71 : vector<8x128xf32> to vector<1x8x128xf32>
    tpu.vector_store %arg2[%c40, %c0_113, %c0_114], %206 {strides = array<i32>} : memref<64x8x128xf32, #tpu.memory_space<vmem>>, vector<1x8x128xf32>,
    %c41 = arith.constant 41 : index
    %c0_115 = arith.constant 0 : index
    %c0_116 = arith.constant 0 : index
    %207 = vector.load %arg2[%c41, %c0_115, %c0_116] : memref<64x8x128xf32, #tpu.memory_space<vmem>>, vector<1x8x128xf32>
    %208 = vector.shape_cast %207 : vector<1x8x128xf32> to vector<8x128xf32>
    %209 = vector.shape_cast %174 : vector<8x128xf32> to vector<1x8x128xf32>
    tpu.vector_store %arg2[%c41, %c0_115, %c0_116], %209 {strides = array<i32>} : memref<64x8x128xf32, #tpu.memory_space<vmem>>, vector<1x8x128xf32>,
    %c42 = arith.constant 42 : index
    %c0_117 = arith.constant 0 : index
    %c0_118 = arith.constant 0 : index
    %210 = vector.load %arg2[%c42, %c0_117, %c0_118] : memref<64x8x128xf32, #tpu.memory_space<vmem>>, vector<1x8x128xf32>
    %211 = vector.shape_cast %210 : vector<1x8x128xf32> to vector<8x128xf32>
    %212 = vector.shape_cast %176 : vector<8x128xf32> to vector<1x8x128xf32>
    tpu.vector_store %arg2[%c42, %c0_117, %c0_118], %212 {strides = array<i32>} : memref<64x8x128xf32, #tpu.memory_space<vmem>>, vector<1x8x128xf32>,
    %c43 = arith.constant 43 : index
    %c0_119 = arith.constant 0 : index
    %c0_120 = arith.constant 0 : index
    %213 = vector.load %arg2[%c43, %c0_119, %c0_120] : memref<64x8x128xf32, #tpu.memory_space<vmem>>, vector<1x8x128xf32>
    %214 = vector.shape_cast %213 : vector<1x8x128xf32> to vector<8x128xf32>
    %215 = vector.shape_cast %179 : vector<8x128xf32> to vector<1x8x128xf32>
    tpu.vector_store %arg2[%c43, %c0_119, %c0_120], %215 {strides = array<i32>} : memref<64x8x128xf32, #tpu.memory_space<vmem>>, vector<1x8x128xf32>,
    %c44 = arith.constant 44 : index
    %c0_121 = arith.constant 0 : index
    %c0_122 = arith.constant 0 : index
    %216 = vector.load %arg2[%c44, %c0_121, %c0_122] : memref<64x8x128xf32, #tpu.memory_space<vmem>>, vector<1x8x128xf32>
    %217 = vector.shape_cast %216 : vector<1x8x128xf32> to vector<8x128xf32>
    %218 = vector.shape_cast %0 : vector<8x128xf32> to vector<1x8x128xf32>
    tpu.vector_store %arg2[%c44, %c0_121, %c0_122], %218 {strides = array<i32>} : memref<64x8x128xf32, #tpu.memory_space<vmem>>, vector<1x8x128xf32>,
    %c45 = arith.constant 45 : index
    %c0_123 = arith.constant 0 : index
    %c0_124 = arith.constant 0 : index
    %219 = vector.load %arg2[%c45, %c0_123, %c0_124] : memref<64x8x128xf32, #tpu.memory_space<vmem>>, vector<1x8x128xf32>
    %220 = vector.shape_cast %219 : vector<1x8x128xf32> to vector<8x128xf32>
    %221 = vector.shape_cast %0 : vector<8x128xf32> to vector<1x8x128xf32>
    tpu.vector_store %arg2[%c45, %c0_123, %c0_124], %221 {strides = array<i32>} : memref<64x8x128xf32, #tpu.memory_space<vmem>>, vector<1x8x128xf32>,
    %c46 = arith.constant 46 : index
    %c0_125 = arith.constant 0 : index
    %c0_126 = arith.constant 0 : index
    %222 = vector.load %arg2[%c46, %c0_125, %c0_126] : memref<64x8x128xf32, #tpu.memory_space<vmem>>, vector<1x8x128xf32>
    %223 = vector.shape_cast %222 : vector<1x8x128xf32> to vector<8x128xf32>
    %224 = vector.shape_cast %0 : vector<8x128xf32> to vector<1x8x128xf32>
    tpu.vector_store %arg2[%c46, %c0_125, %c0_126], %224 {strides = array<i32>} : memref<64x8x128xf32, #tpu.memory_space<vmem>>, vector<1x8x128xf32>,
    %c47 = arith.constant 47 : index
    %c0_127 = arith.constant 0 : index
    %c0_128 = arith.constant 0 : index
    %225 = vector.load %arg2[%c47, %c0_127, %c0_128] : memref<64x8x128xf32, #tpu.memory_space<vmem>>, vector<1x8x128xf32>
    %226 = vector.shape_cast %225 : vector<1x8x128xf32> to vector<8x128xf32>
    %227 = vector.shape_cast %1 : vector<8x128xf32> to vector<1x8x128xf32>
    tpu.vector_store %arg2[%c47, %c0_127, %c0_128], %227 {strides = array<i32>} : memref<64x8x128xf32, #tpu.memory_space<vmem>>, vector<1x8x128xf32>,
    %c3_129 = arith.constant 3 : index
    %c0_130 = arith.constant 0 : index
    %c0_131 = arith.constant 0 : index
    %228 = vector.load %arg1[%c3_129, %c0_130, %c0_131] : memref<4x8x128xf32, #tpu.memory_space<vmem>>, vector<1x8x128xf32>
    %229 = vector.shape_cast %228 : vector<1x8x128xf32> to vector<8x128xf32>
    %230 = math.cos %229 : vector<8x128xf32>
    %231 = math.sin %229 : vector<8x128xf32>
    %cst_132 = arith.constant 0.000000e+00 : f32
    %232 = vector.broadcast %cst_132 : f32 to vector<8x128xf32>
    %233 = arith.subf %232, %231 : vector<8x128xf32>
    %cst_133 = arith.constant 1.500000e-01 : f32
    %234 = vector.broadcast %cst_133 : f32 to vector<8x128xf32>
    %235 = arith.mulf %234, %230 : vector<8x128xf32>
    %cst_134 = arith.constant 1.500000e-01 : f32
    %236 = vector.broadcast %cst_134 : f32 to vector<8x128xf32>
    %237 = arith.mulf %236, %231 : vector<8x128xf32>
    %238 = arith.mulf %80, %230 : vector<8x128xf32>
    %239 = arith.mulf %155, %231 : vector<8x128xf32>
    %240 = arith.addf %238, %239 : vector<8x128xf32>
    %241 = arith.mulf %80, %233 : vector<8x128xf32>
    %242 = arith.mulf %155, %230 : vector<8x128xf32>
    %243 = arith.addf %241, %242 : vector<8x128xf32>
    %244 = arith.mulf %80, %235 : vector<8x128xf32>
    %245 = arith.mulf %155, %237 : vector<8x128xf32>
    %cst_135 = arith.constant 1.000000e-01 : f32
    %246 = vector.broadcast %cst_135 : f32 to vector<8x128xf32>
    %247 = arith.mulf %158, %246 : vector<8x128xf32>
    %248 = arith.addf %244, %245 : vector<8x128xf32>
    %249 = arith.addf %248, %247 : vector<8x128xf32>
    %250 = arith.addf %249, %160 : vector<8x128xf32>
    %251 = arith.mulf %90, %230 : vector<8x128xf32>
    %252 = arith.mulf %165, %231 : vector<8x128xf32>
    %253 = arith.addf %251, %252 : vector<8x128xf32>
    %254 = arith.mulf %90, %233 : vector<8x128xf32>
    %255 = arith.mulf %165, %230 : vector<8x128xf32>
    %256 = arith.addf %254, %255 : vector<8x128xf32>
    %257 = arith.mulf %90, %235 : vector<8x128xf32>
    %258 = arith.mulf %165, %237 : vector<8x128xf32>
    %cst_136 = arith.constant 1.000000e-01 : f32
    %259 = vector.broadcast %cst_136 : f32 to vector<8x128xf32>
    %260 = arith.mulf %168, %259 : vector<8x128xf32>
    %261 = arith.addf %257, %258 : vector<8x128xf32>
    %262 = arith.addf %261, %260 : vector<8x128xf32>
    %263 = arith.addf %262, %170 : vector<8x128xf32>
    %264 = arith.mulf %71, %230 : vector<8x128xf32>
    %265 = arith.mulf %174, %231 : vector<8x128xf32>
    %266 = arith.addf %264, %265 : vector<8x128xf32>
    %267 = arith.mulf %71, %233 : vector<8x128xf32>
    %268 = arith.mulf %174, %230 : vector<8x128xf32>
    %269 = arith.addf %267, %268 : vector<8x128xf32>
    %270 = arith.mulf %71, %235 : vector<8x128xf32>
    %271 = arith.mulf %174, %237 : vector<8x128xf32>
    %cst_137 = arith.constant 1.000000e-01 : f32
    %272 = vector.broadcast %cst_137 : f32 to vector<8x128xf32>
    %273 = arith.mulf %176, %272 : vector<8x128xf32>
    %274 = arith.addf %270, %271 : vector<8x128xf32>
    %275 = arith.addf %274, %273 : vector<8x128xf32>
    %276 = arith.addf %275, %179 : vector<8x128xf32>
    %c48 = arith.constant 48 : index
    %c0_138 = arith.constant 0 : index
    %c0_139 = arith.constant 0 : index
    %277 = vector.load %arg2[%c48, %c0_138, %c0_139] : memref<64x8x128xf32, #tpu.memory_space<vmem>>, vector<1x8x128xf32>
    %278 = vector.shape_cast %277 : vector<1x8x128xf32> to vector<8x128xf32>
    %279 = vector.shape_cast %240 : vector<8x128xf32> to vector<1x8x128xf32>
    tpu.vector_store %arg2[%c48, %c0_138, %c0_139], %279 {strides = array<i32>} : memref<64x8x128xf32, #tpu.memory_space<vmem>>, vector<1x8x128xf32>,
    %c49 = arith.constant 49 : index
    %c0_140 = arith.constant 0 : index
    %c0_141 = arith.constant 0 : index
    %280 = vector.load %arg2[%c49, %c0_140, %c0_141] : memref<64x8x128xf32, #tpu.memory_space<vmem>>, vector<1x8x128xf32>
    %281 = vector.shape_cast %280 : vector<1x8x128xf32> to vector<8x128xf32>
    %282 = vector.shape_cast %243 : vector<8x128xf32> to vector<1x8x128xf32>
    tpu.vector_store %arg2[%c49, %c0_140, %c0_141], %282 {strides = array<i32>} : memref<64x8x128xf32, #tpu.memory_space<vmem>>, vector<1x8x128xf32>,
    %c50 = arith.constant 50 : index
    %c0_142 = arith.constant 0 : index
    %c0_143 = arith.constant 0 : index
    %283 = vector.load %arg2[%c50, %c0_142, %c0_143] : memref<64x8x128xf32, #tpu.memory_space<vmem>>, vector<1x8x128xf32>
    %284 = vector.shape_cast %283 : vector<1x8x128xf32> to vector<8x128xf32>
    %285 = vector.shape_cast %158 : vector<8x128xf32> to vector<1x8x128xf32>
    tpu.vector_store %arg2[%c50, %c0_142, %c0_143], %285 {strides = array<i32>} : memref<64x8x128xf32, #tpu.memory_space<vmem>>, vector<1x8x128xf32>,
    %c51 = arith.constant 51 : index
    %c0_144 = arith.constant 0 : index
    %c0_145 = arith.constant 0 : index
    %286 = vector.load %arg2[%c51, %c0_144, %c0_145] : memref<64x8x128xf32, #tpu.memory_space<vmem>>, vector<1x8x128xf32>
    %287 = vector.shape_cast %286 : vector<1x8x128xf32> to vector<8x128xf32>
    %288 = vector.shape_cast %250 : vector<8x128xf32> to vector<1x8x128xf32>
    tpu.vector_store %arg2[%c51, %c0_144, %c0_145], %288 {strides = array<i32>} : memref<64x8x128xf32, #tpu.memory_space<vmem>>, vector<1x8x128xf32>,
    %c52 = arith.constant 52 : index
    %c0_146 = arith.constant 0 : index
    %c0_147 = arith.constant 0 : index
    %289 = vector.load %arg2[%c52, %c0_146, %c0_147] : memref<64x8x128xf32, #tpu.memory_space<vmem>>, vector<1x8x128xf32>
    %290 = vector.shape_cast %289 : vector<1x8x128xf32> to vector<8x128xf32>
    %291 = vector.shape_cast %253 : vector<8x128xf32> to vector<1x8x128xf32>
    tpu.vector_store %arg2[%c52, %c0_146, %c0_147], %291 {strides = array<i32>} : memref<64x8x128xf32, #tpu.memory_space<vmem>>, vector<1x8x128xf32>,
    %c53 = arith.constant 53 : index
    %c0_148 = arith.constant 0 : index
    %c0_149 = arith.constant 0 : index
    %292 = vector.load %arg2[%c53, %c0_148, %c0_149] : memref<64x8x128xf32, #tpu.memory_space<vmem>>, vector<1x8x128xf32>
    %293 = vector.shape_cast %292 : vector<1x8x128xf32> to vector<8x128xf32>
    %294 = vector.shape_cast %256 : vector<8x128xf32> to vector<1x8x128xf32>
    tpu.vector_store %arg2[%c53, %c0_148, %c0_149], %294 {strides = array<i32>} : memref<64x8x128xf32, #tpu.memory_space<vmem>>, vector<1x8x128xf32>,
    %c54 = arith.constant 54 : index
    %c0_150 = arith.constant 0 : index
    %c0_151 = arith.constant 0 : index
    %295 = vector.load %arg2[%c54, %c0_150, %c0_151] : memref<64x8x128xf32, #tpu.memory_space<vmem>>, vector<1x8x128xf32>
    %296 = vector.shape_cast %295 : vector<1x8x128xf32> to vector<8x128xf32>
    %297 = vector.shape_cast %168 : vector<8x128xf32> to vector<1x8x128xf32>
    tpu.vector_store %arg2[%c54, %c0_150, %c0_151], %297 {strides = array<i32>} : memref<64x8x128xf32, #tpu.memory_space<vmem>>, vector<1x8x128xf32>,
    %c55 = arith.constant 55 : index
    %c0_152 = arith.constant 0 : index
    %c0_153 = arith.constant 0 : index
    %298 = vector.load %arg2[%c55, %c0_152, %c0_153] : memref<64x8x128xf32, #tpu.memory_space<vmem>>, vector<1x8x128xf32>
    %299 = vector.shape_cast %298 : vector<1x8x128xf32> to vector<8x128xf32>
    %300 = vector.shape_cast %263 : vector<8x128xf32> to vector<1x8x128xf32>
    tpu.vector_store %arg2[%c55, %c0_152, %c0_153], %300 {strides = array<i32>} : memref<64x8x128xf32, #tpu.memory_space<vmem>>, vector<1x8x128xf32>,
    %c56 = arith.constant 56 : index
    %c0_154 = arith.constant 0 : index
    %c0_155 = arith.constant 0 : index
    %301 = vector.load %arg2[%c56, %c0_154, %c0_155] : memref<64x8x128xf32, #tpu.memory_space<vmem>>, vector<1x8x128xf32>
    %302 = vector.shape_cast %301 : vector<1x8x128xf32> to vector<8x128xf32>
    %303 = vector.shape_cast %266 : vector<8x128xf32> to vector<1x8x128xf32>
    tpu.vector_store %arg2[%c56, %c0_154, %c0_155], %303 {strides = array<i32>} : memref<64x8x128xf32, #tpu.memory_space<vmem>>, vector<1x8x128xf32>,
    %c57 = arith.constant 57 : index
    %c0_156 = arith.constant 0 : index
    %c0_157 = arith.constant 0 : index
    %304 = vector.load %arg2[%c57, %c0_156, %c0_157] : memref<64x8x128xf32, #tpu.memory_space<vmem>>, vector<1x8x128xf32>
    %305 = vector.shape_cast %304 : vector<1x8x128xf32> to vector<8x128xf32>
    %306 = vector.shape_cast %269 : vector<8x128xf32> to vector<1x8x128xf32>
    tpu.vector_store %arg2[%c57, %c0_156, %c0_157], %306 {strides = array<i32>} : memref<64x8x128xf32, #tpu.memory_space<vmem>>, vector<1x8x128xf32>,
    %c58 = arith.constant 58 : index
    %c0_158 = arith.constant 0 : index
    %c0_159 = arith.constant 0 : index
    %307 = vector.load %arg2[%c58, %c0_158, %c0_159] : memref<64x8x128xf32, #tpu.memory_space<vmem>>, vector<1x8x128xf32>
    %308 = vector.shape_cast %307 : vector<1x8x128xf32> to vector<8x128xf32>
    %309 = vector.shape_cast %176 : vector<8x128xf32> to vector<1x8x128xf32>
    tpu.vector_store %arg2[%c58, %c0_158, %c0_159], %309 {strides = array<i32>} : memref<64x8x128xf32, #tpu.memory_space<vmem>>, vector<1x8x128xf32>,
    %c59 = arith.constant 59 : index
    %c0_160 = arith.constant 0 : index
    %c0_161 = arith.constant 0 : index
    %310 = vector.load %arg2[%c59, %c0_160, %c0_161] : memref<64x8x128xf32, #tpu.memory_space<vmem>>, vector<1x8x128xf32>
    %311 = vector.shape_cast %310 : vector<1x8x128xf32> to vector<8x128xf32>
    %312 = vector.shape_cast %276 : vector<8x128xf32> to vector<1x8x128xf32>
    tpu.vector_store %arg2[%c59, %c0_160, %c0_161], %312 {strides = array<i32>} : memref<64x8x128xf32, #tpu.memory_space<vmem>>, vector<1x8x128xf32>,
    %c60 = arith.constant 60 : index
    %c0_162 = arith.constant 0 : index
    %c0_163 = arith.constant 0 : index
    %313 = vector.load %arg2[%c60, %c0_162, %c0_163] : memref<64x8x128xf32, #tpu.memory_space<vmem>>, vector<1x8x128xf32>
    %314 = vector.shape_cast %313 : vector<1x8x128xf32> to vector<8x128xf32>
    %315 = vector.shape_cast %0 : vector<8x128xf32> to vector<1x8x128xf32>
    tpu.vector_store %arg2[%c60, %c0_162, %c0_163], %315 {strides = array<i32>} : memref<64x8x128xf32, #tpu.memory_space<vmem>>, vector<1x8x128xf32>,
    %c61 = arith.constant 61 : index
    %c0_164 = arith.constant 0 : index
    %c0_165 = arith.constant 0 : index
    %316 = vector.load %arg2[%c61, %c0_164, %c0_165] : memref<64x8x128xf32, #tpu.memory_space<vmem>>, vector<1x8x128xf32>
    %317 = vector.shape_cast %316 : vector<1x8x128xf32> to vector<8x128xf32>
    %318 = vector.shape_cast %0 : vector<8x128xf32> to vector<1x8x128xf32>
    tpu.vector_store %arg2[%c61, %c0_164, %c0_165], %318 {strides = array<i32>} : memref<64x8x128xf32, #tpu.memory_space<vmem>>, vector<1x8x128xf32>,
    %c62 = arith.constant 62 : index
    %c0_166 = arith.constant 0 : index
    %c0_167 = arith.constant 0 : index
    %319 = vector.load %arg2[%c62, %c0_166, %c0_167] : memref<64x8x128xf32, #tpu.memory_space<vmem>>, vector<1x8x128xf32>
    %320 = vector.shape_cast %319 : vector<1x8x128xf32> to vector<8x128xf32>
    %321 = vector.shape_cast %0 : vector<8x128xf32> to vector<1x8x128xf32>
    tpu.vector_store %arg2[%c62, %c0_166, %c0_167], %321 {strides = array<i32>} : memref<64x8x128xf32, #tpu.memory_space<vmem>>, vector<1x8x128xf32>,
    %c63 = arith.constant 63 : index
    %c0_168 = arith.constant 0 : index
    %c0_169 = arith.constant 0 : index
    %322 = vector.load %arg2[%c63, %c0_168, %c0_169] : memref<64x8x128xf32, #tpu.memory_space<vmem>>, vector<1x8x128xf32>
    %323 = vector.shape_cast %322 : vector<1x8x128xf32> to vector<8x128xf32>
    %324 = vector.shape_cast %1 : vector<8x128xf32> to vector<1x8x128xf32>
    tpu.vector_store %arg2[%c63, %c0_168, %c0_169], %324 {strides = array<i32>} : memref<64x8x128xf32, #tpu.memory_space<vmem>>, vector<1x8x128xf32>,
    return
  }
  func.func @transform_0(%arg0: i32) -> (i32, i32, i32) {
    %c0_i32 = arith.constant 0 : i32
    %c0_i32_0 = arith.constant 0 : i32
    %c0_i32_1 = arith.constant 0 : i32
    return %c0_i32, %arg0, %c0_i32_0 : i32, i32, i32
  }
  func.func @transform_1(%arg0: i32) -> (i32, i32, i32) {
    %c0_i32 = arith.constant 0 : i32
    %c0_i32_0 = arith.constant 0 : i32
    %c0_i32_1 = arith.constant 0 : i32
    return %c0_i32, %arg0, %c0_i32_0 : i32, i32, i32
  }
}

</mosaic_0001>

<llo_original>
// kernel: tpu_custom_call.1
$region0: #{tpu_custom_call.1}
  #allocation0 [shape = 'u32[]', space=smem, size = 0x4, offset = 0x4, fixed_abs, tag = 'smem constant byte address 0x4 - core index']
  #allocation1 [shape = 'u32[72,128]{1,0:T(1,128)}', space=vmem, size = 0x9000, scoped, tag = 'internal scratch']
  %s0 = inlined_call_operand.hbm [shape: f32[4,8,128], index: 0, kind: input, shape index: {}]
  %s1 = inlined_call_operand.hbm [shape: f32[64,8,128], index: 1, kind: output, shape index: {}]
  %s2 = sld [smem:[#allocation0]]
  $region18: #{tpu_custom_call.1} parent=0
    _
  %s4 = ssub.s32 1, %s2
  %s5 = scalar_select 0, %s4, %s2
  $region1: #{tpu_custom_call.1} parent=0
    #allocation2 [shape = 'u8[16384]{0}', space=vmem, size = 0x4000, scoped, tag = 'input window, operand 0, single buffered']
    #allocation3 [shape = 's32[1]{0}', space=sflag, size = 0x4, scoped, tag = 'scoped memory for tpu_custom_call.1']
    #allocation4 [shape = 's32[1]{0}', space=sflag, size = 0x4, scoped, tag = 'scoped memory for tpu_custom_call.1']
    #allocation5 [shape = 'u8[262144]{0}', space=vmem, size = 0x40000, scoped, tag = 'output window, operand 0, single buffered']
    %6 = vsyncpa [#allocation3], 0
    %7 = vsyncpa [#allocation4], 0
    // Predicated region
    $region2: #{tpu_custom_call.1} parent=1 // pred_check
      _
    $region3: #{tpu_custom_call.1} parent=1 // pred_check_branch
      %9 = sbr.rel (0) target = $region5
    $region4: #{tpu_custom_call.1} parent=1 // pred_region
      %11 = vsyncadd [#allocation3], 0
      %s12 = sshll.u32 %s0, 4
      %s13 = int_to_ptr.hbm [resolvable:$true] %s12
      %s14 = sshll.u32 [#allocation2], 4
      %s15 = int_to_ptr.vmem [resolvable:$true] %s14
      %20 = dma.hbm_to_vmem [thread:$0]  %s13, 512, %s15, [#allocation3], 128, 128, 8
    $region5: #{tpu_custom_call.1} parent=1 // pred_fallthru
      _
    // Predicated region
    $region6: #{tpu_custom_call.1} parent=1 // pred_check
      _
    $region7: #{tpu_custom_call.1} parent=1 // pred_check_branch
      %22 = sbr.rel (0) target = $region9
    $region8: #{tpu_custom_call.1} parent=1 // pred_region
      %24 = dma.done [#allocation3], 512
    $region9: #{tpu_custom_call.1} parent=1 // pred_fallthru
      _
    %v25 = vld [vmem:[#allocation2] sm:$0xff]
    %v26 = vand.u32 2147483647, %v25
    %vm27 = vcmp.le.f32.partialorder %v26, 0.7853982
    %vm28 = vcmp.lt.s32.totalorder %v25, 0
    %v29 = vand.u32 %v25, 2139095040
    %v30 = vshrl.u32 %v29, 23
    %v31 = vsub.s32 %v30, 127
    %v32 = vand.u32 2147483647, %v25
    %v33 = vand.u32 %v32, 8388607
    %v34 = vor.u32 %v33, 8388608
    %v35 = vsub.s32 0, %v34
    %v36 = vadd.s32 %v31, 1
    %vm37 = vcmp.gt.s32.totalorder %v36, 0
    %v38 = vsel %vm37, %v36, 0
    %v39 = vshrl.u32 %v38, 5
    %v40 = vand.u32 %v38, 31
    %v41 = vsub.s32 32, %v40
    %v42 = vshrl.u32 683565275, %v41
    %v43 = vshll.u32 683565275, %v40
    %v44 = vshrl.u32 2475754826, %v41
    %v45 = vor.u32 %v43, %v44
    %v46 = vshll.u32 2475754826, %v40
    %v47 = vshrl.u32 2131351028, %v41
    %v48 = vor.u32 %v46, %v47
    %v49 = vshll.u32 2131351028, %v40
    %v50 = vshrl.u32 2102212464, %v41
    %v51 = vor.u32 %v49, %v50
    %v52 = vshll.u32 2102212464, %v40
    %v53 = vshrl.u32 920167782, %v41
    %v54 = vor.u32 %v52, %v53
    %v55 = vshll.u32 920167782, %v40
    %v56 = vshrl.u32 1326507024, %v41
    %v57 = vor.u32 %v55, %v56
    %vm58 = vcmp.lt.s32.totalorder %v39, 1
    %vm59 = vcmp.lt.s32.totalorder %v39, 2
    %vm60 = vcmp.lt.s32.totalorder %v39, 3
    %vm61 = vcmp.lt.s32.totalorder %v39, 4
    %v62 = vsel %vm58, %v42, %v45
    %v63 = vsel %vm61, %v51, 2102212464
    %v64 = vsel %vm60, %v48, %v63
    %v65 = vsel %vm59, %v62, %v64
    %v66 = vsel %vm58, %v45, %v48
    %v67 = vsel %vm61, %v54, 920167782
    %v68 = vsel %vm60, %v51, %v67
    %v69 = vsel %vm59, %v66, %v68
    %v70 = vsel %vm58, %v48, %v51
    %v71 = vsel %vm61, %v57, 1326507024
    %v72 = vsel %vm60, %v54, %v71
    %v73 = vsel %vm59, %v70, %v72
    %v74 = vshll.u32 %v34, 8
    %v75 = vand.u32 %v74, 65535
    %v76 = vshrl.u32 %v74, 16
    %v77 = vand.u32 %v73, 65535
    %v78 = vshrl.u32 %v73, 16
    %v79 = vmul.u32 %v75, %v77
    %v80 = vmul.u32 %v75, %v78
    %v81 = vmul.u32 %v76, %v77
    %v82 = vmul.u32 %v76, %v78
    %v83 = vshll.u32 %v80, 16
    %v84 = vshrl.u32 %v80, 16
    %v85 = vshll.u32 %v81, 16
    %v86 = vshrl.u32 %v81, 16
    %vm87 = vc.u32 %v79, %v83
    %v88 = vsel %vm87, 1, 0
    %v89 = vadd.s32 %v79, %v83
    %v90 = vadd.s32 %v82, %v88
    %vm91 = vc.u32 %v89, %v85
    %v92 = vsel %vm91, 1, 0
    %v93 = vadd.s32 %v89, %v85
    %v94 = vadd.s32 %v90, %v92
    %v95 = vadd.s32 %v94, %v84
    %v96 = vadd.s32 %v95, %v86
    %v97 = vand.u32 %v74, 65535
    %v98 = vshrl.u32 %v74, 16
    %v99 = vand.u32 %v69, 65535
    %v100 = vshrl.u32 %v69, 16
    %v101 = vmul.u32 %v97, %v99
    %v102 = vmul.u32 %v97, %v100
    %v103 = vmul.u32 %v98, %v99
    %v104 = vmul.u32 %v98, %v100
    %v105 = vshll.u32 %v102, 16
    %v106 = vshrl.u32 %v102, 16
    %v107 = vshll.u32 %v103, 16
    %v108 = vshrl.u32 %v103, 16
    %vm109 = vc.u32 %v101, %v105
    %v110 = vsel %vm109, 1, 0
    %v111 = vadd.s32 %v101, %v105
    %v112 = vadd.s32 %v104, %v110
    %vm113 = vc.u32 %v111, %v107
    %v114 = vsel %vm113, 1, 0
    %v115 = vadd.s32 %v111, %v107
    %v116 = vadd.s32 %v112, %v114
    %v117 = vadd.s32 %v116, %v106
    %v118 = vadd.s32 %v117, %v108
    %v119 = vmul.u32 %v74, %v65
    %v120 = vadd.s32 %v96, %v115
    %vm121 = vc.u32 %v96, %v115
    %v122 = vadd.s32 %v118, 1
    %v123 = vsel %vm121, %v122, %v118
    %v124 = vadd.s32 %v119, %v123
    %v125 = vadd.s32 %v124, 536870912
    %v126 = vshrl.u32 %v125, 30
    %v127 = vshll.u32 %v126, 30
    %v128 = vsub.s32 %v124, %v127
    %vm129 = vcmp.lt.s32.totalorder %v128, 0
    %v130 = vsub.s32 0, %v128
    %v131 = vsel %vm129, %v130, %v128
    %v132 = vclz %v131
    %v133 = vsub.s32 %v132, 2
    %vm134 = vcmp.gt.s32.totalorder 0, %v133
    %v135 = vsel %vm134, 0, %v133
    %v136 = vsub.s32 32, %v135
    %v137 = vshll.u32 %v128, %v135
    %v138 = vshrl.u32 %v120, %v136
    %v139 = vor.u32 %v137, %v138
    %v140 = vsub.s32 4294967266, %v135
    %v141 = vadd.s32 %v140, 127
    %v142 = vshll.u32 %v141, 23
    %v143 = vor.u32 4788187, %v142
    %v144 = vand.u32 2147483647, %v143
    %v146 = vcvt.s32.f32 %v139
    %v147 = vmul.f32 %v146, %v144
    %v148 = vxor.u32 %v147, 2147483648
    %v149 = vsel %vm28, %v148, %v147
    %v150 = vsub.s32 4, %v126
    %v151 = vsel %vm28, %v150, %v126
    %v152 = vsel %vm27, %v25, %v149
    %v153 = vsel %vm27, 0, %v151
    %v154 = vmul.f32 %v152, %v152
    %v155 = vmul.f32 %v154, -0.001358992
    %v156 = vadd.f32 %v155, 0.041655596
    %v157 = vmul.f32 %v154, %v156
    %v158 = vadd.f32 %v157, -0.4999988
    %v159 = vmul.f32 %v154, %v158
    %v160 = vadd.f32 1.0, %v159
    %v161 = vmul.f32 %v152, %v152
    %v162 = vmul.f32 %v161, -0.00019511016
    %v163 = vadd.f32 %v162, 0.008332121
    %v164 = vmul.f32 %v161, %v163
    %v165 = vadd.f32 %v164, -0.16666654
    %v166 = vmul.f32 %v161, %v165
    %v167 = vadd.f32 %v166, 1.0
    %v168 = vmul.f32 %v167, %v152
    %vm169 = vweird.f32 %v25
    %v170 = vand.u32 %v153, 3
    %vm171 = vcmp.lt.s32.totalorder %v170, 2
    %vm172 = vcmp.eq.s32.totalorder %v170, 0
    %v173 = vxor.u32 %v168, 2147483648
    %v174 = vsel %vm172, %v160, %v173
    %vm175 = vcmp.eq.s32.totalorder %v170, 2
    %v176 = vxor.u32 %v160, 2147483648
    %v177 = vsel %vm175, %v176, %v168
    %v178 = vsel %vm171, %v174, %v177
    %v179 = vsel %vm169, nan, %v178
    %v180 = vand.u32 2147483647, %v25
    %vm181 = vcmp.le.f32.partialorder %v180, 0.7853982
    %vm182 = vcmp.lt.s32.totalorder %v25, 0
    %v183 = vand.u32 %v25, 2139095040
    %v184 = vshrl.u32 %v183, 23
    %v185 = vsub.s32 %v184, 127
    %v186 = vand.u32 2147483647, %v25
    %v187 = vand.u32 %v186, 8388607
    %v188 = vor.u32 %v187, 8388608
    %v189 = vsub.s32 0, %v188
    %v190 = vadd.s32 %v185, 1
    %vm191 = vcmp.gt.s32.totalorder %v190, 0
    %v192 = vsel %vm191, %v190, 0
    %v193 = vshrl.u32 %v192, 5
    %v194 = vand.u32 %v192, 31
    %v195 = vsub.s32 32, %v194
    %v196 = vshrl.u32 683565275, %v195
    %v197 = vshll.u32 683565275, %v194
    %v198 = vshrl.u32 2475754826, %v195
    %v199 = vor.u32 %v197, %v198
    %v200 = vshll.u32 2475754826, %v194
    %v201 = vshrl.u32 2131351028, %v195
    %v202 = vor.u32 %v200, %v201
    %v203 = vshll.u32 2131351028, %v194
    %v204 = vshrl.u32 2102212464, %v195
    %v205 = vor.u32 %v203, %v204
    %v206 = vshll.u32 2102212464, %v194
    %v207 = vshrl.u32 920167782, %v195
    %v208 = vor.u32 %v206, %v207
    %v209 = vshll.u32 920167782, %v194
    %v210 = vshrl.u32 1326507024, %v195
    %v211 = vor.u32 %v209, %v210
    %vm212 = vcmp.lt.s32.totalorder %v193, 1
    %vm213 = vcmp.lt.s32.totalorder %v193, 2
    %vm214 = vcmp.lt.s32.totalorder %v193, 3
    %vm215 = vcmp.lt.s32.totalorder %v193, 4
    %v216 = vsel %vm212, %v196, %v199
    %v217 = vsel %vm215, %v205, 2102212464
    %v218 = vsel %vm214, %v202, %v217
    %v219 = vsel %vm213, %v216, %v218
    %v220 = vsel %vm212, %v199, %v202
    %v221 = vsel %vm215, %v208, 920167782
    %v222 = vsel %vm214, %v205, %v221
    %v223 = vsel %vm213, %v220, %v222
    %v224 = vsel %vm212, %v202, %v205
    %v225 = vsel %vm215, %v211, 1326507024
    %v226 = vsel %vm214, %v208, %v225
    %v227 = vsel %vm213, %v224, %v226
    %v228 = vshll.u32 %v188, 8
    %v229 = vand.u32 %v228, 65535
    %v230 = vshrl.u32 %v228, 16
    %v231 = vand.u32 %v227, 65535
    %v232 = vshrl.u32 %v227, 16
    %v233 = vmul.u32 %v229, %v231
    %v234 = vmul.u32 %v229, %v232
    %v235 = vmul.u32 %v230, %v231
    %v236 = vmul.u32 %v230, %v232
    %v237 = vshll.u32 %v234, 16
    %v238 = vshrl.u32 %v234, 16
    %v239 = vshll.u32 %v235, 16
    %v240 = vshrl.u32 %v235, 16
    %vm241 = vc.u32 %v233, %v237
    %v242 = vsel %vm241, 1, 0
    %v243 = vadd.s32 %v233, %v237
    %v244 = vadd.s32 %v236, %v242
    %vm245 = vc.u32 %v243, %v239
    %v246 = vsel %vm245, 1, 0
    %v247 = vadd.s32 %v243, %v239
    %v248 = vadd.s32 %v244, %v246
    %v249 = vadd.s32 %v248, %v238
    %v250 = vadd.s32 %v249, %v240
    %v251 = vand.u32 %v228, 65535
    %v252 = vshrl.u32 %v228, 16
    %v253 = vand.u32 %v223, 65535
    %v254 = vshrl.u32 %v223, 16
    %v255 = vmul.u32 %v251, %v253
    %v256 = vmul.u32 %v251, %v254
    %v257 = vmul.u32 %v252, %v253
    %v258 = vmul.u32 %v252, %v254
    %v259 = vshll.u32 %v256, 16
    %v260 = vshrl.u32 %v256, 16
    %v261 = vshll.u32 %v257, 16
    %v262 = vshrl.u32 %v257, 16
    %vm263 = vc.u32 %v255, %v259
    %v264 = vsel %vm263, 1, 0
    %v265 = vadd.s32 %v255, %v259
    %v266 = vadd.s32 %v258, %v264
    %vm267 = vc.u32 %v265, %v261
    %v268 = vsel %vm267, 1, 0
    %v269 = vadd.s32 %v265, %v261
    %v270 = vadd.s32 %v266, %v268
    %v271 = vadd.s32 %v270, %v260
    %v272 = vadd.s32 %v271, %v262
    %v273 = vmul.u32 %v228, %v219
    %v274 = vadd.s32 %v250, %v269
    %vm275 = vc.u32 %v250, %v269
    %v276 = vadd.s32 %v272, 1
    %v277 = vsel %vm275, %v276, %v272
    %v278 = vadd.s32 %v273, %v277
    %v279 = vadd.s32 %v278, 536870912
    %v280 = vshrl.u32 %v279, 30
    %v281 = vshll.u32 %v280, 30
    %v282 = vsub.s32 %v278, %v281
    %vm283 = vcmp.lt.s32.totalorder %v282, 0
    %v284 = vsub.s32 0, %v282
    %v285 = vsel %vm283, %v284, %v282
    %v286 = vclz %v285
    %v287 = vsub.s32 %v286, 2
    %vm288 = vcmp.gt.s32.totalorder 0, %v287
    %v289 = vsel %vm288, 0, %v287
    %v290 = vsub.s32 32, %v289
    %v291 = vshll.u32 %v282, %v289
    %v292 = vshrl.u32 %v274, %v290
    %v293 = vor.u32 %v291, %v292
    %v294 = vsub.s32 4294967266, %v289
    %v295 = vadd.s32 %v294, 127
    %v296 = vshll.u32 %v295, 23
    %v297 = vor.u32 4788187, %v296
    %v298 = vand.u32 2147483647, %v297
    %v300 = vcvt.s32.f32 %v293
    %v301 = vmul.f32 %v300, %v298
    %v302 = vxor.u32 %v301, 2147483648
    %v303 = vsel %vm182, %v302, %v301
    %v304 = vsub.s32 4, %v280
    %v305 = vsel %vm182, %v304, %v280
    %v306 = vsel %vm181, %v25, %v303
    %v307 = vsel %vm181, 0, %v305
    %v308 = vmul.f32 %v306, %v306
    %v309 = vmul.f32 %v308, -0.001358992
    %v310 = vadd.f32 %v309, 0.041655596
    %v311 = vmul.f32 %v308, %v310
    %v312 = vadd.f32 %v311, -0.4999988
    %v313 = vmul.f32 %v308, %v312
    %v314 = vadd.f32 1.0, %v313
    %v315 = vmul.f32 %v306, %v306
    %v316 = vmul.f32 %v315, -0.00019511016
    %v317 = vadd.f32 %v316, 0.008332121
    %v318 = vmul.f32 %v315, %v317
    %v319 = vadd.f32 %v318, -0.16666654
    %v320 = vmul.f32 %v315, %v319
    %v321 = vadd.f32 %v320, 1.0
    %v322 = vmul.f32 %v321, %v306
    %vm323 = vweird.f32 %v25
    %v324 = vadd.s32 %v307, 3
    %v325 = vand.u32 %v324, 3
    %vm326 = vcmp.lt.s32.totalorder %v325, 2
    %vm327 = vcmp.eq.s32.totalorder %v325, 0
    %v328 = vxor.u32 %v322, 2147483648
    %v329 = vsel %vm327, %v314, %v328
    %vm330 = vcmp.eq.s32.totalorder %v325, 2
    %v331 = vxor.u32 %v314, 2147483648
    %v332 = vsel %vm330, %v331, %v322
    %v333 = vsel %vm326, %v329, %v332
    %v334 = vsel %vm323, nan, %v333
    %v335 = vmul.f32 %v334, -4.371139e-08
    %v336 = vsub.f32 0.0, %v335
    %v337 = vmul.f32 %v179, -4.371139e-08
    %v338 = vsub.f32 0.0, %v179
    %v339 = vmul.f32 %v179, 0.1
    %v340 = vmul.f32 %v334, 0.1
    %341 = vst [vmem:[#allocation5] sm:$0xff] %v179
    %s342 = scalar_lea.vmem [#allocation5], 8
    %343 = vst [vmem:[%s342] sm:$0xff] %v336
    %s344 = scalar_lea.vmem [#allocation5], 16
    %345 = vst [vmem:[%s344] sm:$0xff] %v334
    %s346 = scalar_lea.vmem [#allocation5], 24
    %347 = vst [vmem:[%s346] sm:$0xff] %v339
    %s348 = scalar_lea.vmem [#allocation5], 32
    %349 = vst [vmem:[%s348] sm:$0xff] %v334
    %s350 = scalar_lea.vmem [#allocation5], 40
    %351 = vst [vmem:[%s350] sm:$0xff] %v337
    %s352 = scalar_lea.vmem [#allocation5], 48
    %353 = vst [vmem:[%s352] sm:$0xff] %v338
    %s354 = scalar_lea.vmem [#allocation5], 56
    %355 = vst [vmem:[%s354] sm:$0xff] %v340
    %s356 = scalar_lea.vmem [#allocation5], 64
    %357 = vst [vmem:[%s356] sm:$0xff] 0.0
    %s358 = scalar_lea.vmem [#allocation5], 72
    %359 = vst [vmem:[%s358] sm:$0xff] 1.0
    %s360 = scalar_lea.vmem [#allocation5], 80
    %361 = vst [vmem:[%s360] sm:$0xff] -4.371139e-08
    %s362 = scalar_lea.vmem [#allocation5], 88
    %363 = vst [vmem:[%s362] sm:$0xff] 0.3
    %s364 = scalar_lea.vmem [#allocation5], 96
    %365 = vst [vmem:[%s364] sm:$0xff] 0.0
    %s366 = scalar_lea.vmem [#allocation5], 104
    %367 = vst [vmem:[%s366] sm:$0xff] 0.0
    %s368 = scalar_lea.vmem [#allocation5], 112
    %369 = vst [vmem:[%s368] sm:$0xff] 0.0
    %s370 = scalar_lea.vmem [#allocation5], 120
    %371 = vst [vmem:[%s370] sm:$0xff] 1.0
    %s372 = scalar_lea.vmem [#allocation2], 8
    %v373 = vld [vmem:[%s372] sm:$0xff]
    %v374 = vand.u32 2147483647, %v373
    %vm375 = vcmp.le.f32.partialorder %v374, 0.7853982
    %vm376 = vcmp.lt.s32.totalorder %v373, 0
    %v377 = vand.u32 %v373, 2139095040
    %v378 = vshrl.u32 %v377, 23
    %v379 = vsub.s32 %v378, 127
    %v380 = vand.u32 2147483647, %v373
    %v381 = vand.u32 %v380, 8388607
    %v382 = vor.u32 %v381, 8388608
    %v383 = vsub.s32 0, %v382
    %v384 = vadd.s32 %v379, 1
    %vm385 = vcmp.gt.s32.totalorder %v384, 0
    %v386 = vsel %vm385, %v384, 0
    %v387 = vshrl.u32 %v386, 5
    %v388 = vand.u32 %v386, 31
    %v389 = vsub.s32 32, %v388
    %v390 = vshrl.u32 683565275, %v389
    %v391 = vshll.u32 683565275, %v388
    %v392 = vshrl.u32 2475754826, %v389
    %v393 = vor.u32 %v391, %v392
    %v394 = vshll.u32 2475754826, %v388
    %v395 = vshrl.u32 2131351028, %v389
    %v396 = vor.u32 %v394, %v395
    %v397 = vshll.u32 2131351028, %v388
    %v398 = vshrl.u32 2102212464, %v389
    %v399 = vor.u32 %v397, %v398
    %v400 = vshll.u32 2102212464, %v388
    %v401 = vshrl.u32 920167782, %v389
    %v402 = vor.u32 %v400, %v401
    %v403 = vshll.u32 920167782, %v388
    %v404 = vshrl.u32 1326507024, %v389
    %v405 = vor.u32 %v403, %v404
    %vm406 = vcmp.lt.s32.totalorder %v387, 1
    %vm407 = vcmp.lt.s32.totalorder %v387, 2
    %vm408 = vcmp.lt.s32.totalorder %v387, 3
    %vm409 = vcmp.lt.s32.totalorder %v387, 4
    %v410 = vsel %vm406, %v390, %v393
    %v411 = vsel %vm409, %v399, 2102212464
    %v412 = vsel %vm408, %v396, %v411
    %v413 = vsel %vm407, %v410, %v412
    %v414 = vsel %vm406, %v393, %v396
    %v415 = vsel %vm409, %v402, 920167782
    %v416 = vsel %vm408, %v399, %v415
    %v417 = vsel %vm407, %v414, %v416
    %v418 = vsel %vm406, %v396, %v399
    %v419 = vsel %vm409, %v405, 1326507024
    %v420 = vsel %vm408, %v402, %v419
    %v421 = vsel %vm407, %v418, %v420
    %v422 = vshll.u32 %v382, 8
    %v423 = vand.u32 %v422, 65535
    %v424 = vshrl.u32 %v422, 16
    %v425 = vand.u32 %v421, 65535
    %v426 = vshrl.u32 %v421, 16
    %v427 = vmul.u32 %v423, %v425
    %v428 = vmul.u32 %v423, %v426
    %v429 = vmul.u32 %v424, %v425
    %v430 = vmul.u32 %v424, %v426
    %v431 = vshll.u32 %v428, 16
    %v432 = vshrl.u32 %v428, 16
    %v433 = vshll.u32 %v429, 16
    %v434 = vshrl.u32 %v429, 16
    %vm435 = vc.u32 %v427, %v431
    %v436 = vsel %vm435, 1, 0
    %v437 = vadd.s32 %v427, %v431
    %v438 = vadd.s32 %v430, %v436
    %vm439 = vc.u32 %v437, %v433
    %v440 = vsel %vm439, 1, 0
    %v441 = vadd.s32 %v437, %v433
    %v442 = vadd.s32 %v438, %v440
    %v443 = vadd.s32 %v442, %v432
    %v444 = vadd.s32 %v443, %v434
    %v445 = vand.u32 %v422, 65535
    %v446 = vshrl.u32 %v422, 16
    %v447 = vand.u32 %v417, 65535
    %v448 = vshrl.u32 %v417, 16
    %v449 = vmul.u32 %v445, %v447
    %v450 = vmul.u32 %v445, %v448
    %v451 = vmul.u32 %v446, %v447
    %v452 = vmul.u32 %v446, %v448
    %v453 = vshll.u32 %v450, 16
    %v454 = vshrl.u32 %v450, 16
    %v455 = vshll.u32 %v451, 16
    %v456 = vshrl.u32 %v451, 16
    %vm457 = vc.u32 %v449, %v453
    %v458 = vsel %vm457, 1, 0
    %v459 = vadd.s32 %v449, %v453
    %v460 = vadd.s32 %v452, %v458
    %vm461 = vc.u32 %v459, %v455
    %v462 = vsel %vm461, 1, 0
    %v463 = vadd.s32 %v459, %v455
    %v464 = vadd.s32 %v460, %v462
    %v465 = vadd.s32 %v464, %v454
    %v466 = vadd.s32 %v465, %v456
    %v467 = vmul.u32 %v422, %v413
    %v468 = vadd.s32 %v444, %v463
    %vm469 = vc.u32 %v444, %v463
    %v470 = vadd.s32 %v466, 1
    %v471 = vsel %vm469, %v470, %v466
    %v472 = vadd.s32 %v467, %v471
    %v473 = vadd.s32 %v472, 536870912
    %v474 = vshrl.u32 %v473, 30
    %v475 = vshll.u32 %v474, 30
    %v476 = vsub.s32 %v472, %v475
    %vm477 = vcmp.lt.s32.totalorder %v476, 0
    %v478 = vsub.s32 0, %v476
    %v479 = vsel %vm477, %v478, %v476
    %v480 = vclz %v479
    %v481 = vsub.s32 %v480, 2
    %vm482 = vcmp.gt.s32.totalorder 0, %v481
    %v483 = vsel %vm482, 0, %v481
    %v484 = vsub.s32 32, %v483
    %v485 = vshll.u32 %v476, %v483
    %v486 = vshrl.u32 %v468, %v484
    %v487 = vor.u32 %v485, %v486
    %v488 = vsub.s32 4294967266, %v483
    %v489 = vadd.s32 %v488, 127
    %v490 = vshll.u32 %v489, 23
    %v491 = vor.u32 4788187, %v490
    %v492 = vand.u32 2147483647, %v491
    %v494 = vcvt.s32.f32 %v487
    %v495 = vmul.f32 %v494, %v492
    %v496 = vxor.u32 %v495, 2147483648
    %v497 = vsel %vm376, %v496, %v495
    %v498 = vsub.s32 4, %v474
    %v499 = vsel %vm376, %v498, %v474
    %v500 = vsel %vm375, %v373, %v497
    %v501 = vsel %vm375, 0, %v499
    %v502 = vmul.f32 %v500, %v500
    %v503 = vmul.f32 %v502, -0.001358992
    %v504 = vadd.f32 %v503, 0.041655596
    %v505 = vmul.f32 %v502, %v504
    %v506 = vadd.f32 %v505, -0.4999988
    %v507 = vmul.f32 %v502, %v506
    %v508 = vadd.f32 1.0, %v507
    %v509 = vmul.f32 %v500, %v500
    %v510 = vmul.f32 %v509, -0.00019511016
    %v511 = vadd.f32 %v510, 0.008332121
    %v512 = vmul.f32 %v509, %v511
    %v513 = vadd.f32 %v512, -0.16666654
    %v514 = vmul.f32 %v509, %v513
    %v515 = vadd.f32 %v514, 1.0
    %v516 = vmul.f32 %v515, %v500
    %vm517 = vweird.f32 %v373
    %v518 = vand.u32 %v501, 3
    %vm519 = vcmp.lt.s32.totalorder %v518, 2
    %vm520 = vcmp.eq.s32.totalorder %v518, 0
    %v521 = vxor.u32 %v516, 2147483648
    %v522 = vsel %vm520, %v508, %v521
    %vm523 = vcmp.eq.s32.totalorder %v518, 2
    %v524 = vxor.u32 %v508, 2147483648
    %v525 = vsel %vm523, %v524, %v516
    %v526 = vsel %vm519, %v522, %v525
    %v527 = vsel %vm517, nan, %v526
    %v528 = vand.u32 2147483647, %v373
    %vm529 = vcmp.le.f32.partialorder %v528, 0.7853982
    %vm530 = vcmp.lt.s32.totalorder %v373, 0
    %v531 = vand.u32 %v373, 2139095040
    %v532 = vshrl.u32 %v531, 23
    %v533 = vsub.s32 %v532, 127
    %v534 = vand.u32 2147483647, %v373
    %v535 = vand.u32 %v534, 8388607
    %v536 = vor.u32 %v535, 8388608
    %v537 = vsub.s32 0, %v536
    %v538 = vadd.s32 %v533, 1
    %vm539 = vcmp.gt.s32.totalorder %v538, 0
    %v540 = vsel %vm539, %v538, 0
    %v541 = vshrl.u32 %v540, 5
    %v542 = vand.u32 %v540, 31
    %v543 = vsub.s32 32, %v542
    %v544 = vshrl.u32 683565275, %v543
    %v545 = vshll.u32 683565275, %v542
    %v546 = vshrl.u32 2475754826, %v543
    %v547 = vor.u32 %v545, %v546
    %v548 = vshll.u32 2475754826, %v542
    %v549 = vshrl.u32 2131351028, %v543
    %v550 = vor.u32 %v548, %v549
    %v551 = vshll.u32 2131351028, %v542
    %v552 = vshrl.u32 2102212464, %v543
    %v553 = vor.u32 %v551, %v552
    %v554 = vshll.u32 2102212464, %v542
    %v555 = vshrl.u32 920167782, %v543
    %v556 = vor.u32 %v554, %v555
    %v557 = vshll.u32 920167782, %v542
    %v558 = vshrl.u32 1326507024, %v543
    %v559 = vor.u32 %v557, %v558
    %vm560 = vcmp.lt.s32.totalorder %v541, 1
    %vm561 = vcmp.lt.s32.totalorder %v541, 2
    %vm562 = vcmp.lt.s32.totalorder %v541, 3
    %vm563 = vcmp.lt.s32.totalorder %v541, 4
    %v564 = vsel %vm560, %v544, %v547
    %v565 = vsel %vm563, %v553, 2102212464
    %v566 = vsel %vm562, %v550, %v565
    %v567 = vsel %vm561, %v564, %v566
    %v568 = vsel %vm560, %v547, %v550
    %v569 = vsel %vm563, %v556, 920167782
    %v570 = vsel %vm562, %v553, %v569
    %v571 = vsel %vm561, %v568, %v570
    %v572 = vsel %vm560, %v550, %v553
    %v573 = vsel %vm563, %v559, 1326507024
    %v574 = vsel %vm562, %v556, %v573
    %v575 = vsel %vm561, %v572, %v574
    %v576 = vshll.u32 %v536, 8
    %v577 = vand.u32 %v576, 65535
    %v578 = vshrl.u32 %v576, 16
    %v579 = vand.u32 %v575, 65535
    %v580 = vshrl.u32 %v575, 16
    %v581 = vmul.u32 %v577, %v579
    %v582 = vmul.u32 %v577, %v580
    %v583 = vmul.u32 %v578, %v579
    %v584 = vmul.u32 %v578, %v580
    %v585 = vshll.u32 %v582, 16
    %v586 = vshrl.u32 %v582, 16
    %v587 = vshll.u32 %v583, 16
    %v588 = vshrl.u32 %v583, 16
    %vm589 = vc.u32 %v581, %v585
    %v590 = vsel %vm589, 1, 0
    %v591 = vadd.s32 %v581, %v585
    %v592 = vadd.s32 %v584, %v590
    %vm593 = vc.u32 %v591, %v587
    %v594 = vsel %vm593, 1, 0
    %v595 = vadd.s32 %v591, %v587
    %v596 = vadd.s32 %v592, %v594
    %v597 = vadd.s32 %v596, %v586
    %v598 = vadd.s32 %v597, %v588
    %v599 = vand.u32 %v576, 65535
    %v600 = vshrl.u32 %v576, 16
    %v601 = vand.u32 %v571, 65535
    %v602 = vshrl.u32 %v571, 16
    %v603 = vmul.u32 %v599, %v601
    %v604 = vmul.u32 %v599, %v602
    %v605 = vmul.u32 %v600, %v601
    %v606 = vmul.u32 %v600, %v602
    %v607 = vshll.u32 %v604, 16
    %v608 = vshrl.u32 %v604, 16
    %v609 = vshll.u32 %v605, 16
    %v610 = vshrl.u32 %v605, 16
    %vm611 = vc.u32 %v603, %v607
    %v612 = vsel %vm611, 1, 0
    %v613 = vadd.s32 %v603, %v607
    %v614 = vadd.s32 %v606, %v612
    %vm615 = vc.u32 %v613, %v609
    %v616 = vsel %vm615, 1, 0
    %v617 = vadd.s32 %v613, %v609
    %v618 = vadd.s32 %v614, %v616
    %v619 = vadd.s32 %v618, %v608
    %v620 = vadd.s32 %v619, %v610
    %v621 = vmul.u32 %v576, %v567
    %v622 = vadd.s32 %v598, %v617
    %vm623 = vc.u32 %v598, %v617
    %v624 = vadd.s32 %v620, 1
    %v625 = vsel %vm623, %v624, %v620
    %v626 = vadd.s32 %v621, %v625
    %v627 = vadd.s32 %v626, 536870912
    %v628 = vshrl.u32 %v627, 30
    %v629 = vshll.u32 %v628, 30
    %v630 = vsub.s32 %v626, %v629
    %vm631 = vcmp.lt.s32.totalorder %v630, 0
    %v632 = vsub.s32 0, %v630
    %v633 = vsel %vm631, %v632, %v630
    %v634 = vclz %v633
    %v635 = vsub.s32 %v634, 2
    %vm636 = vcmp.gt.s32.totalorder 0, %v635
    %v637 = vsel %vm636, 0, %v635
    %v638 = vsub.s32 32, %v637
    %v639 = vshll.u32 %v630, %v637
    %v640 = vshrl.u32 %v622, %v638
    %v641 = vor.u32 %v639, %v640
    %v642 = vsub.s32 4294967266, %v637
    %v643 = vadd.s32 %v642, 127
    %v644 = vshll.u32 %v643, 23
    %v645 = vor.u32 4788187, %v644
    %v646 = vand.u32 2147483647, %v645
    %v648 = vcvt.s32.f32 %v641
    %v649 = vmul.f32 %v648, %v646
    %v650 = vxor.u32 %v649, 2147483648
    %v651 = vsel %vm530, %v650, %v649
    %v652 = vsub.s32 4, %v628
    %v653 = vsel %vm530, %v652, %v628
    %v654 = vsel %vm529, %v373, %v651
    %v655 = vsel %vm529, 0, %v653
    %v656 = vmul.f32 %v654, %v654
    %v657 = vmul.f32 %v656, -0.001358992
    %v658 = vadd.f32 %v657, 0.041655596
    %v659 = vmul.f32 %v656, %v658
    %v660 = vadd.f32 %v659, -0.4999988
    %v661 = vmul.f32 %v656, %v660
    %v662 = vadd.f32 1.0, %v661
    %v663 = vmul.f32 %v654, %v654
    %v664 = vmul.f32 %v663, -0.00019511016
    %v665 = vadd.f32 %v664, 0.008332121
    %v666 = vmul.f32 %v663, %v665
    %v667 = vadd.f32 %v666, -0.16666654
    %v668 = vmul.f32 %v663, %v667
    %v669 = vadd.f32 %v668, 1.0
    %v670 = vmul.f32 %v669, %v654
    %vm671 = vweird.f32 %v373
    %v672 = vadd.s32 %v655, 3
    %v673 = vand.u32 %v672, 3
    %vm674 = vcmp.lt.s32.totalorder %v673, 2
    %vm675 = vcmp.eq.s32.totalorder %v673, 0
    %v676 = vxor.u32 %v670, 2147483648
    %v677 = vsel %vm675, %v662, %v676
    %vm678 = vcmp.eq.s32.totalorder %v673, 2
    %v679 = vxor.u32 %v662, 2147483648
    %v680 = vsel %vm678, %v679, %v670
    %v681 = vsel %vm674, %v677, %v680
    %v682 = vsel %vm671, nan, %v681
    %v683 = vsub.f32 0.0, %v682
    %v684 = vmul.f32 %v527, 0.25
    %v685 = vmul.f32 %v682, 0.25
    %v686 = vmul.f32 %v179, %v527
    %v687 = vmul.f32 %v336, %v682
    %v688 = vadd.f32 %v686, %v687
    %v689 = vmul.f32 %v179, %v683
    %v690 = vmul.f32 %v336, %v527
    %v691 = vadd.f32 %v689, %v690
    %v692 = vmul.f32 %v179, %v684
    %v693 = vmul.f32 %v336, %v685
    %v694 = vadd.f32 %v692, %v693
    %v695 = vadd.f32 %v694, %v339
    %v696 = vmul.f32 %v334, %v527
    %v697 = vmul.f32 %v337, %v682
    %v698 = vadd.f32 %v696, %v697
    %v699 = vmul.f32 %v334, %v683
    %v700 = vmul.f32 %v337, %v527
    %v701 = vadd.f32 %v699, %v700
    %v702 = vmul.f32 %v334, %v684
    %v703 = vmul.f32 %v337, %v685
    %v704 = vadd.f32 %v702, %v703
    %v705 = vadd.f32 %v704, %v340
    %v706 = vadd.f32 %v685, 0.3
    %s707 = scalar_lea.vmem [#allocation5], 128
    %708 = vst [vmem:[%s707] sm:$0xff] %v688
    %s709 = scalar_lea.vmem [#allocation5], 136
    %710 = vst [vmem:[%s709] sm:$0xff] %v691
    %s711 = scalar_lea.vmem [#allocation5], 144
    %712 = vst [vmem:[%s711] sm:$0xff] %v334
    %s713 = scalar_lea.vmem [#allocation5], 152
    %714 = vst [vmem:[%s713] sm:$0xff] %v695
    %s715 = scalar_lea.vmem [#allocation5], 160
    %716 = vst [vmem:[%s715] sm:$0xff] %v698
    %s717 = scalar_lea.vmem [#allocation5], 168
    %718 = vst [vmem:[%s717] sm:$0xff] %v701
    %s719 = scalar_lea.vmem [#allocation5], 176
    %720 = vst [vmem:[%s719] sm:$0xff] %v338
    %s721 = scalar_lea.vmem [#allocation5], 184
    %722 = vst [vmem:[%s721] sm:$0xff] %v705
    %s723 = scalar_lea.vmem [#allocation5], 192
    %724 = vst [vmem:[%s723] sm:$0xff] %v682
    %s725 = scalar_lea.vmem [#allocation5], 200
    %726 = vst [vmem:[%s725] sm:$0xff] %v527
    %s727 = scalar_lea.vmem [#allocation5], 208
    %728 = vst [vmem:[%s727] sm:$0xff] -4.371139e-08
    %s729 = scalar_lea.vmem [#allocation5], 216
    %730 = vst [vmem:[%s729] sm:$0xff] %v706
    %s731 = scalar_lea.vmem [#allocation5], 224
    %732 = vst [vmem:[%s731] sm:$0xff] 0.0
    %s733 = scalar_lea.vmem [#allocation5], 232
    %734 = vst [vmem:[%s733] sm:$0xff] 0.0
    %s735 = scalar_lea.vmem [#allocation5], 240
    %736 = vst [vmem:[%s735] sm:$0xff] 0.0
    %s737 = scalar_lea.vmem [#allocation5], 248
    %738 = vst [vmem:[%s737] sm:$0xff] 1.0
    %s739 = scalar_lea.vmem [#allocation2], 16
    %v740 = vld [vmem:[%s739] sm:$0xff]
    %v741 = vmul.f32 %v691, -4.371139e-08
    %v742 = vmul.f32 %v334, -1.0
    %v743 = vadd.f32 %v741, %v742
    %v744 = vadd.f32 %v691, %v335
    %v745 = vmul.f32 %v334, %v740
    %v746 = vadd.f32 %v745, %v695
    %v747 = vmul.f32 %v701, -4.371139e-08
    %v748 = vmul.f32 %v338, -1.0
    %v749 = vadd.f32 %v747, %v748
    %v750 = vmul.f32 %v338, -4.371139e-08
    %v751 = vadd.f32 %v701, %v750
    %v752 = vmul.f32 %v338, %v740
    %v753 = vadd.f32 %v752, %v705
    %v754 = vmul.f32 %v527, -4.371139e-08
    %v755 = vadd.f32 %v754, 4.371139e-08
    %v756 = vadd.f32 %v527, 1.9106855e-15
    %v757 = vmul.f32 %v740, -4.371139e-08
    %v758 = vadd.f32 %v757, %v706
    %s759 = scalar_lea.vmem [#allocation5], 256
    %760 = vst [vmem:[%s759] sm:$0xff] %v688
    %s761 = scalar_lea.vmem [#allocation5], 264
    %762 = vst [vmem:[%s761] sm:$0xff] %v743
    %s763 = scalar_lea.vmem [#allocation5], 272
    %764 = vst [vmem:[%s763] sm:$0xff] %v744
    %s765 = scalar_lea.vmem [#allocation5], 280
    %766 = vst [vmem:[%s765] sm:$0xff] %v746
    %s767 = scalar_lea.vmem [#allocation5], 288
    %768 = vst [vmem:[%s767] sm:$0xff] %v698
    %s769 = scalar_lea.vmem [#allocation5], 296
    %770 = vst [vmem:[%s769] sm:$0xff] %v749
    %s771 = scalar_lea.vmem [#allocation5], 304
    %772 = vst [vmem:[%s771] sm:$0xff] %v751
    %s773 = scalar_lea.vmem [#allocation5], 312
    %774 = vst [vmem:[%s773] sm:$0xff] %v753
    %s775 = scalar_lea.vmem [#allocation5], 320
    %776 = vst [vmem:[%s775] sm:$0xff] %v682
    %s777 = scalar_lea.vmem [#allocation5], 328
    %778 = vst [vmem:[%s777] sm:$0xff] %v755
    %s779 = scalar_lea.vmem [#allocation5], 336
    %780 = vst [vmem:[%s779] sm:$0xff] %v756
    %s781 = scalar_lea.vmem [#allocation5], 344
    %782 = vst [vmem:[%s781] sm:$0xff] %v758
    %s783 = scalar_lea.vmem [#allocation5], 352
    %784 = vst [vmem:[%s783] sm:$0xff] 0.0
    %s785 = scalar_lea.vmem [#allocation5], 360
    %786 = vst [vmem:[%s785] sm:$0xff] 0.0
    %s787 = scalar_lea.vmem [#allocation5], 368
    %788 = vst [vmem:[%s787] sm:$0xff] 0.0
    %s789 = scalar_lea.vmem [#allocation5], 376
    %790 = vst [vmem:[%s789] sm:$0xff] 1.0
    %s791 = scalar_lea.vmem [#allocation2], 24
    %v792 = vld [vmem:[%s791] sm:$0xff]
    %v793 = vand.u32 2147483647, %v792
    %vm794 = vcmp.le.f32.partialorder %v793, 0.7853982
    %vm795 = vcmp.lt.s32.totalorder %v792, 0
    %v796 = vand.u32 %v792, 2139095040
    %v797 = vshrl.u32 %v796, 23
    %v798 = vsub.s32 %v797, 127
    %v799 = vand.u32 2147483647, %v792
    %v800 = vand.u32 %v799, 8388607
    %v801 = vor.u32 %v800, 8388608
    %v802 = vsub.s32 0, %v801
    %v803 = vadd.s32 %v798, 1
    %vm804 = vcmp.gt.s32.totalorder %v803, 0
    %v805 = vsel %vm804, %v803, 0
    %v806 = vshrl.u32 %v805, 5
    %v807 = vand.u32 %v805, 31
    %v808 = vsub.s32 32, %v807
    %v809 = vshrl.u32 683565275, %v808
    %v810 = vshll.u32 683565275, %v807
    %v811 = vshrl.u32 2475754826, %v808
    %v812 = vor.u32 %v810, %v811
    %v813 = vshll.u32 2475754826, %v807
    %v814 = vshrl.u32 2131351028, %v808
    %v815 = vor.u32 %v813, %v814
    %v816 = vshll.u32 2131351028, %v807
    %v817 = vshrl.u32 2102212464, %v808
    %v818 = vor.u32 %v816, %v817
    %v819 = vshll.u32 2102212464, %v807
    %v820 = vshrl.u32 920167782, %v808
    %v821 = vor.u32 %v819, %v820
    %v822 = vshll.u32 920167782, %v807
    %v823 = vshrl.u32 1326507024, %v808
    %v824 = vor.u32 %v822, %v823
    %vm825 = vcmp.lt.s32.totalorder %v806, 1
    %vm826 = vcmp.lt.s32.totalorder %v806, 2
    %vm827 = vcmp.lt.s32.totalorder %v806, 3
    %vm828 = vcmp.lt.s32.totalorder %v806, 4
    %v829 = vsel %vm825, %v809, %v812
    %v830 = vsel %vm828, %v818, 2102212464
    %v831 = vsel %vm827, %v815, %v830
    %v832 = vsel %vm826, %v829, %v831
    %v833 = vsel %vm825, %v812, %v815
    %v834 = vsel %vm828, %v821, 920167782
    %v835 = vsel %vm827, %v818, %v834
    %v836 = vsel %vm826, %v833, %v835
    %v837 = vsel %vm825, %v815, %v818
    %v838 = vsel %vm828, %v824, 1326507024
    %v839 = vsel %vm827, %v821, %v838
    %v840 = vsel %vm826, %v837, %v839
    %v841 = vshll.u32 %v801, 8
    %v842 = vand.u32 %v841, 65535
    %v843 = vshrl.u32 %v841, 16
    %v844 = vand.u32 %v840, 65535
    %v845 = vshrl.u32 %v840, 16
    %v846 = vmul.u32 %v842, %v844
    %v847 = vmul.u32 %v842, %v845
    %v848 = vmul.u32 %v843, %v844
    %v849 = vmul.u32 %v843, %v845
    %v850 = vshll.u32 %v847, 16
    %v851 = vshrl.u32 %v847, 16
    %v852 = vshll.u32 %v848, 16
    %v853 = vshrl.u32 %v848, 16
    %vm854 = vc.u32 %v846, %v850
    %v855 = vsel %vm854, 1, 0
    %v856 = vadd.s32 %v846, %v850
    %v857 = vadd.s32 %v849, %v855
    %vm858 = vc.u32 %v856, %v852
    %v859 = vsel %vm858, 1, 0
    %v860 = vadd.s32 %v856, %v852
    %v861 = vadd.s32 %v857, %v859
    %v862 = vadd.s32 %v861, %v851
    %v863 = vadd.s32 %v862, %v853
    %v864 = vand.u32 %v841, 65535
    %v865 = vshrl.u32 %v841, 16
    %v866 = vand.u32 %v836, 65535
    %v867 = vshrl.u32 %v836, 16
    %v868 = vmul.u32 %v864, %v866
    %v869 = vmul.u32 %v864, %v867
    %v870 = vmul.u32 %v865, %v866
    %v871 = vmul.u32 %v865, %v867
    %v872 = vshll.u32 %v869, 16
    %v873 = vshrl.u32 %v869, 16
    %v874 = vshll.u32 %v870, 16
    %v875 = vshrl.u32 %v870, 16
    %vm876 = vc.u32 %v868, %v872
    %v877 = vsel %vm876, 1, 0
    %v878 = vadd.s32 %v868, %v872
    %v879 = vadd.s32 %v871, %v877
    %vm880 = vc.u32 %v878, %v874
    %v881 = vsel %vm880, 1, 0
    %v882 = vadd.s32 %v878, %v874
    %v883 = vadd.s32 %v879, %v881
    %v884 = vadd.s32 %v883, %v873
    %v885 = vadd.s32 %v884, %v875
    %v886 = vmul.u32 %v841, %v832
    %v887 = vadd.s32 %v863, %v882
    %vm888 = vc.u32 %v863, %v882
    %v889 = vadd.s32 %v885, 1
    %v890 = vsel %vm888, %v889, %v885
    %v891 = vadd.s32 %v886, %v890
    %v892 = vadd.s32 %v891, 536870912
    %v893 = vshrl.u32 %v892, 30
    %v894 = vshll.u32 %v893, 30
    %v895 = vsub.s32 %v891, %v894
    %vm896 = vcmp.lt.s32.totalorder %v895, 0
    %v897 = vsub.s32 0, %v895
    %v898 = vsel %vm896, %v897, %v895
    %v899 = vclz %v898
    %v900 = vsub.s32 %v899, 2
    %vm901 = vcmp.gt.s32.totalorder 0, %v900
    %v902 = vsel %vm901, 0, %v900
    %v903 = vsub.s32 32, %v902
    %v904 = vshll.u32 %v895, %v902
    %v905 = vshrl.u32 %v887, %v903
    %v906 = vor.u32 %v904, %v905
    %v907 = vsub.s32 4294967266, %v902
    %v908 = vadd.s32 %v907, 127
    %v909 = vshll.u32 %v908, 23
    %v910 = vor.u32 4788187, %v909
    %v911 = vand.u32 2147483647, %v910
    %v913 = vcvt.s32.f32 %v906
    %v914 = vmul.f32 %v913, %v911
    %v915 = vxor.u32 %v914, 2147483648
    %v916 = vsel %vm795, %v915, %v914
    %v917 = vsub.s32 4, %v893
    %v918 = vsel %vm795, %v917, %v893
    %v919 = vsel %vm794, %v792, %v916
    %v920 = vsel %vm794, 0, %v918
    %v921 = vmul.f32 %v919, %v919
    %v922 = vmul.f32 %v921, -0.001358992
    %v923 = vadd.f32 %v922, 0.041655596
    %v924 = vmul.f32 %v921, %v923
    %v925 = vadd.f32 %v924, -0.4999988
    %v926 = vmul.f32 %v921, %v925
    %v927 = vadd.f32 1.0, %v926
    %v928 = vmul.f32 %v919, %v919
    %v929 = vmul.f32 %v928, -0.00019511016
    %v930 = vadd.f32 %v929, 0.008332121
    %v931 = vmul.f32 %v928, %v930
    %v932 = vadd.f32 %v931, -0.16666654
    %v933 = vmul.f32 %v928, %v932
    %v934 = vadd.f32 %v933, 1.0
    %v935 = vmul.f32 %v934, %v919
    %vm936 = vweird.f32 %v792
    %v937 = vand.u32 %v920, 3
    %vm938 = vcmp.lt.s32.totalorder %v937, 2
    %vm939 = vcmp.eq.s32.totalorder %v937, 0
    %v940 = vxor.u32 %v935, 2147483648
    %v941 = vsel %vm939, %v927, %v940
    %vm942 = vcmp.eq.s32.totalorder %v937, 2
    %v943 = vxor.u32 %v927, 2147483648
    %v944 = vsel %vm942, %v943, %v935
    %v945 = vsel %vm938, %v941, %v944
    %v946 = vsel %vm936, nan, %v945
    %v947 = vand.u32 2147483647, %v792
    %vm948 = vcmp.le.f32.partialorder %v947, 0.7853982
    %vm949 = vcmp.lt.s32.totalorder %v792, 0
    %v950 = vand.u32 %v792, 2139095040
    %v951 = vshrl.u32 %v950, 23
    %v952 = vsub.s32 %v951, 127
    %v953 = vand.u32 2147483647, %v792
    %v954 = vand.u32 %v953, 8388607
    %v955 = vor.u32 %v954, 8388608
    %v956 = vsub.s32 0, %v955
    %v957 = vadd.s32 %v952, 1
    %vm958 = vcmp.gt.s32.totalorder %v957, 0
    %v959 = vsel %vm958, %v957, 0
    %v960 = vshrl.u32 %v959, 5
    %v961 = vand.u32 %v959, 31
    %v962 = vsub.s32 32, %v961
    %v963 = vshrl.u32 683565275, %v962
    %v964 = vshll.u32 683565275, %v961
    %v965 = vshrl.u32 2475754826, %v962
    %v966 = vor.u32 %v964, %v965
    %v967 = vshll.u32 2475754826, %v961
    %v968 = vshrl.u32 2131351028, %v962
    %v969 = vor.u32 %v967, %v968
    %v970 = vshll.u32 2131351028, %v961
    %v971 = vshrl.u32 2102212464, %v962
    %v972 = vor.u32 %v970, %v971
    %v973 = vshll.u32 2102212464, %v961
    %v974 = vshrl.u32 920167782, %v962
    %v975 = vor.u32 %v973, %v974
    %v976 = vshll.u32 920167782, %v961
    %v977 = vshrl.u32 1326507024, %v962
    %v978 = vor.u32 %v976, %v977
    %vm979 = vcmp.lt.s32.totalorder %v960, 1
    %vm980 = vcmp.lt.s32.totalorder %v960, 2
    %vm981 = vcmp.lt.s32.totalorder %v960, 3
    %vm982 = vcmp.lt.s32.totalorder %v960, 4
    %v983 = vsel %vm979, %v963, %v966
    %v984 = vsel %vm982, %v972, 2102212464
    %v985 = vsel %vm981, %v969, %v984
    %v986 = vsel %vm980, %v983, %v985
    %v987 = vsel %vm979, %v966, %v969
    %v988 = vsel %vm982, %v975, 920167782
    %v989 = vsel %vm981, %v972, %v988
    %v990 = vsel %vm980, %v987, %v989
    %v991 = vsel %vm979, %v969, %v972
    %v992 = vsel %vm982, %v978, 1326507024
    %v993 = vsel %vm981, %v975, %v992
    %v994 = vsel %vm980, %v991, %v993
    %v995 = vshll.u32 %v955, 8
    %v996 = vand.u32 %v995, 65535
    %v997 = vshrl.u32 %v995, 16
    %v998 = vand.u32 %v994, 65535
    %v999 = vshrl.u32 %v994, 16
    %v1000 = vmul.u32 %v996, %v998
    %v1001 = vmul.u32 %v996, %v999
    %v1002 = vmul.u32 %v997, %v998
    %v1003 = vmul.u32 %v997, %v999
    %v1004 = vshll.u32 %v1001, 16
    %v1005 = vshrl.u32 %v1001, 16
    %v1006 = vshll.u32 %v1002, 16
    %v1007 = vshrl.u32 %v1002, 16
    %vm1008 = vc.u32 %v1000, %v1004
    %v1009 = vsel %vm1008, 1, 0
    %v1010 = vadd.s32 %v1000, %v1004
    %v1011 = vadd.s32 %v1003, %v1009
    %vm1012 = vc.u32 %v1010, %v1006
    %v1013 = vsel %vm1012, 1, 0
    %v1014 = vadd.s32 %v1010, %v1006
    %v1015 = vadd.s32 %v1011, %v1013
    %v1016 = vadd.s32 %v1015, %v1005
    %v1017 = vadd.s32 %v1016, %v1007
    %v1018 = vand.u32 %v995, 65535
    %v1019 = vshrl.u32 %v995, 16
    %v1020 = vand.u32 %v990, 65535
    %v1021 = vshrl.u32 %v990, 16
    %v1022 = vmul.u32 %v1018, %v1020
    %v1023 = vmul.u32 %v1018, %v1021
    %v1024 = vmul.u32 %v1019, %v1020
    %v1025 = vmul.u32 %v1019, %v1021
    %v1026 = vshll.u32 %v1023, 16
    %v1027 = vshrl.u32 %v1023, 16
    %v1028 = vshll.u32 %v1024, 16
    %v1029 = vshrl.u32 %v1024, 16
    %vm1030 = vc.u32 %v1022, %v1026
    %v1031 = vsel %vm1030, 1, 0
    %v1032 = vadd.s32 %v1022, %v1026
    %v1033 = vadd.s32 %v1025, %v1031
    %vm1034 = vc.u32 %v1032, %v1028
    %v1035 = vsel %vm1034, 1, 0
    %v1036 = vadd.s32 %v1032, %v1028
    %v1037 = vadd.s32 %v1033, %v1035
    %v1038 = vadd.s32 %v1037, %v1027
    %v1039 = vadd.s32 %v1038, %v1029
    %v1040 = vmul.u32 %v995, %v986
    %v1041 = vadd.s32 %v1017, %v1036
    %vm1042 = vc.u32 %v1017, %v1036
    %v1043 = vadd.s32 %v1039, 1
    %v1044 = vsel %vm1042, %v1043, %v1039
    %v1045 = vadd.s32 %v1040, %v1044
    %v1046 = vadd.s32 %v1045, 536870912
    %v1047 = vshrl.u32 %v1046, 30
    %v1048 = vshll.u32 %v1047, 30
    %v1049 = vsub.s32 %v1045, %v1048
    %vm1050 = vcmp.lt.s32.totalorder %v1049, 0
    %v1051 = vsub.s32 0, %v1049
    %v1052 = vsel %vm1050, %v1051, %v1049
    %v1053 = vclz %v1052
    %v1054 = vsub.s32 %v1053, 2
    %vm1055 = vcmp.gt.s32.totalorder 0, %v1054
    %v1056 = vsel %vm1055, 0, %v1054
    %v1057 = vsub.s32 32, %v1056
    %v1058 = vshll.u32 %v1049, %v1056
    %v1059 = vshrl.u32 %v1041, %v1057
    %v1060 = vor.u32 %v1058, %v1059
    %v1061 = vsub.s32 4294967266, %v1056
    %v1062 = vadd.s32 %v1061, 127
    %v1063 = vshll.u32 %v1062, 23
    %v1064 = vor.u32 4788187, %v1063
    %v1065 = vand.u32 2147483647, %v1064
    %v1067 = vcvt.s32.f32 %v1060
    %v1068 = vmul.f32 %v1067, %v1065
    %v1069 = vxor.u32 %v1068, 2147483648
    %v1070 = vsel %vm949, %v1069, %v1068
    %v1071 = vsub.s32 4, %v1047
    %v1072 = vsel %vm949, %v1071, %v1047
    %v1073 = vsel %vm948, %v792, %v1070
    %v1074 = vsel %vm948, 0, %v1072
    %v1075 = vmul.f32 %v1073, %v1073
    %v1076 = vmul.f32 %v1075, -0.001358992
    %v1077 = vadd.f32 %v1076, 0.041655596
    %v1078 = vmul.f32 %v1075, %v1077
    %v1079 = vadd.f32 %v1078, -0.4999988
    %v1080 = vmul.f32 %v1075, %v1079
    %v1081 = vadd.f32 1.0, %v1080
    %v1082 = vmul.f32 %v1073, %v1073
    %v1083 = vmul.f32 %v1082, -0.00019511016
    %v1084 = vadd.f32 %v1083, 0.008332121
    %v1085 = vmul.f32 %v1082, %v1084
    %v1086 = vadd.f32 %v1085, -0.16666654
    %v1087 = vmul.f32 %v1082, %v1086
    %v1088 = vadd.f32 %v1087, 1.0
    %v1089 = vmul.f32 %v1088, %v1073
    %vm1090 = vweird.f32 %v792
    %v1091 = vadd.s32 %v1074, 3
    %v1092 = vand.u32 %v1091, 3
    %vm1093 = vcmp.lt.s32.totalorder %v1092, 2
    %vm1094 = vcmp.eq.s32.totalorder %v1092, 0
    %v1095 = vxor.u32 %v1089, 2147483648
    %v1096 = vsel %vm1094, %v1081, %v1095
    %vm1097 = vcmp.eq.s32.totalorder %v1092, 2
    %v1098 = vxor.u32 %v1081, 2147483648
    %v1099 = vsel %vm1097, %v1098, %v1089
    %v1100 = vsel %vm1093, %v1096, %v1099
    %v1101 = vsel %vm1090, nan, %v1100
    %v1102 = vsub.f32 0.0, %v1101
    %v1103 = vmul.f32 %v946, 0.15
    %v1104 = vmul.f32 %v1101, 0.15
    %v1105 = vmul.f32 %v688, %v946
    %v1106 = vmul.f32 %v743, %v1101
    %v1107 = vadd.f32 %v1105, %v1106
    %v1108 = vmul.f32 %v688, %v1102
    %v1109 = vmul.f32 %v743, %v946
    %v1110 = vadd.f32 %v1108, %v1109
    %v1111 = vmul.f32 %v688, %v1103
    %v1112 = vmul.f32 %v743, %v1104
    %v1113 = vmul.f32 %v744, 0.1
    %v1114 = vadd.f32 %v1111, %v1112
    %v1115 = vadd.f32 %v1114, %v1113
    %v1116 = vadd.f32 %v1115, %v746
    %v1117 = vmul.f32 %v698, %v946
    %v1118 = vmul.f32 %v749, %v1101
    %v1119 = vadd.f32 %v1117, %v1118
    %v1120 = vmul.f32 %v698, %v1102
    %v1121 = vmul.f32 %v749, %v946
    %v1122 = vadd.f32 %v1120, %v1121
    %v1123 = vmul.f32 %v698, %v1103
    %v1124 = vmul.f32 %v749, %v1104
    %v1125 = vmul.f32 %v751, 0.1
    %v1126 = vadd.f32 %v1123, %v1124
    %v1127 = vadd.f32 %v1126, %v1125
    %v1128 = vadd.f32 %v1127, %v753
    %v1129 = vmul.f32 %v682, %v946
    %v1130 = vmul.f32 %v755, %v1101
    %v1131 = vadd.f32 %v1129, %v1130
    %v1132 = vmul.f32 %v682, %v1102
    %v1133 = vmul.f32 %v755, %v946
    %v1134 = vadd.f32 %v1132, %v1133
    %v1135 = vmul.f32 %v682, %v1103
    %v1136 = vmul.f32 %v755, %v1104
    %v1137 = vmul.f32 %v756, 0.1
    %v1138 = vadd.f32 %v1135, %v1136
    %v1139 = vadd.f32 %v1138, %v1137
    %v1140 = vadd.f32 %v1139, %v758
    %s1141 = scalar_lea.vmem [#allocation5], 384
    %1142 = vst [vmem:[%s1141] sm:$0xff] %v1107
    %s1143 = scalar_lea.vmem [#allocation5], 392
    %1144 = vst [vmem:[%s1143] sm:$0xff] %v1110
    %s1145 = scalar_lea.vmem [#allocation5], 400
    %1146 = vst [vmem:[%s1145] sm:$0xff] %v744
    %s1147 = scalar_lea.vmem [#allocation5], 408
    %1148 = vst [vmem:[%s1147] sm:$0xff] %v1116
    %s1149 = scalar_lea.vmem [#allocation5], 416
    %1150 = vst [vmem:[%s1149] sm:$0xff] %v1119
    %s1151 = scalar_lea.vmem [#allocation5], 424
    %1152 = vst [vmem:[%s1151] sm:$0xff] %v1122
    %s1153 = scalar_lea.vmem [#allocation5], 432
    %1154 = vst [vmem:[%s1153] sm:$0xff] %v751
    %s1155 = scalar_lea.vmem [#allocation5], 440
    %1156 = vst [vmem:[%s1155] sm:$0xff] %v1128
    %s1157 = scalar_lea.vmem [#allocation5], 448
    %1158 = vst [vmem:[%s1157] sm:$0xff] %v1131
    %s1159 = scalar_lea.vmem [#allocation5], 456
    %1160 = vst [vmem:[%s1159] sm:$0xff] %v1134
    %s1161 = scalar_lea.vmem [#allocation5], 464
    %1162 = vst [vmem:[%s1161] sm:$0xff] %v756
    %s1163 = scalar_lea.vmem [#allocation5], 472
    %1164 = vst [vmem:[%s1163] sm:$0xff] %v1140
    %s1165 = scalar_lea.vmem [#allocation5], 480
    %1166 = vst [vmem:[%s1165] sm:$0xff] 0.0
    %s1167 = scalar_lea.vmem [#allocation5], 488
    %1168 = vst [vmem:[%s1167] sm:$0xff] 0.0
    %s1169 = scalar_lea.vmem [#allocation5], 496
    %1170 = vst [vmem:[%s1169] sm:$0xff] 0.0
    %s1171 = scalar_lea.vmem [#allocation5], 504
    %1172 = vst [vmem:[%s1171] sm:$0xff] 1.0
    // Predicated region
    $region10: #{tpu_custom_call.1} parent=1 // pred_check
      _
    $region11: #{tpu_custom_call.1} parent=1 // pred_check_branch
      %1174 = sbr.rel (0) target = $region13
    $region12: #{tpu_custom_call.1} parent=1 // pred_region
      %1176 = vsyncadd [#allocation4], 0
      %s1177 = sshll.u32 [#allocation5], 4
      %s1178 = int_to_ptr.vmem [resolvable:$true] %s1177
      %s1179 = sshll.u32 %s1, 4
      %s1180 = int_to_ptr.hbm [resolvable:$true] %s1179
      %1185 = dma.vmem_to_hbm [thread:$0]  %s1178, 8192, %s1180, [#allocation4], 128, 128, 8
    $region13: #{tpu_custom_call.1} parent=1 // pred_fallthru
      _
    // Predicated region
    $region14: #{tpu_custom_call.1} parent=1 // pred_check
      _
    $region15: #{tpu_custom_call.1} parent=1 // pred_check_branch
      %1187 = sbr.rel (0) target = $region17
    $region16: #{tpu_custom_call.1} parent=1 // pred_region
      %1189 = dma.done [#allocation4], 8192
    $region17: #{tpu_custom_call.1} parent=1 // pred_fallthru
      _
    %1190 = vsyncpa [#allocation3], 1
    %1191 = vsyncpa [#allocation4], 1

</llo_original>
